<compile_context>
chip_gen: v5e
topology: v5e:2x2
jax: 0.10.0
libtpu: 0.0.40
codegen_flags: <defaults>
</compile_context>

<pallas_src>
import functools
import math

import jax
import jax.numpy as jnp
import numpy as np
from jax.experimental import pallas as pl
from jax.experimental.pallas import tpu as pltpu


# ---------------------------------------------------------------------------
# Kernel 1: LayerNorm + widened QKV projection + rotary combine (pure VPU rope)
# ---------------------------------------------------------------------------
def _ln_qkv_rope_kernel(x_ref, cos_ref, sin_ref, g_ref, b_ref, w_ref,
                        qo_ref, ko_ref, vo_ref, *, inner, rotate_value):
    f32 = jnp.float32
    x = x_ref[0].astype(f32)                       # (TN, D); cast in-kernel (VPU)

    # LayerNorm (eps=1e-5, biased variance) — f32 elementwise (v5e has no bf16 VPU).
    mu = jnp.mean(x, axis=-1, keepdims=True)
    xc = x - mu
    var = jnp.mean(xc * xc, axis=-1, keepdims=True)
    xn = xc * jax.lax.rsqrt(var + 1e-5)
    xn = xn * g_ref[...].astype(f32) + b_ref[...].astype(f32)

    # One wide matmul produces q, k, v and their rotate_half-ed versions; the
    # rotation (and 1/sqrt(dh) q scale) are folded into the weights in the wrapper.
    qkv = jnp.dot(xn.astype(w_ref.dtype), w_ref[...], preferred_element_type=f32)

    cos_t = cos_ref[0].astype(f32)                 # (TN, inner), head-tiled in wrapper
    sin_t = sin_ref[0].astype(f32)

    q = qkv[:, 0 * inner:1 * inner]
    k = qkv[:, 1 * inner:2 * inner]
    v = qkv[:, 2 * inner:3 * inner]
    q_rot = qkv[:, 3 * inner:4 * inner]
    k_rot = qkv[:, 4 * inner:5 * inner]

    qo_ref[0] = (q * cos_t + q_rot * sin_t).astype(qo_ref.dtype)
    ko_ref[0] = (k * cos_t + k_rot * sin_t).astype(ko_ref.dtype)
    if rotate_value:
        v_rot = qkv[:, 5 * inner:6 * inner]
        vo_ref[0] = (v * cos_t + v_rot * sin_t).astype(vo_ref.dtype)
    else:
        vo_ref[0] = v.astype(vo_ref.dtype)


# ---------------------------------------------------------------------------
# Kernel 2: flash attention (online softmax over KV tiles) + fused output proj
#           (+ inverse-rotary folded into the projection when rotate_value)
# ---------------------------------------------------------------------------
def _flash_attn_out_kernel(*refs, heads, dim_head, kv_tile, rotate_value):
    if rotate_value:
        (q_ref, k_ref, v_ref, cos_ref, sinsw_ref,
         wo_ref, wo_rot_ref, bo_ref, o_ref, o_scr) = refs
    else:
        q_ref, k_ref, v_ref, wo_ref, bo_ref, o_ref, o_scr = refs
        cos_ref = sinsw_ref = wo_rot_ref = None

    f32 = jnp.float32
    dh = dim_head
    tq = q_ref.shape[1]
    n_kv = k_ref.shape[1]
    num_kv_tiles = n_kv // kv_tile

    q_all = q_ref[0]                               # (TQ, inner) bf16, already scaled

    # TODO(synk): static unroll is fine for small `heads`; use a head grid axis /
    #             lax.fori_loop over heads for large head counts.
    for h in range(heads):
        lo = h * dh
        q_h = q_all[:, lo:lo + dh]                 # (TQ, dh) bf16

        def kv_step(t, carry, lo=lo, q_h=q_h):
            m_i, l_i, acc = carry
            row0 = pl.multiple_of(t * kv_tile, kv_tile)
            k_t = k_ref[0, pl.ds(row0, kv_tile), lo:lo + dh]   # (TK, dh) bf16
            v_t = v_ref[0, pl.ds(row0, kv_tile), lo:lo + dh]
            s = jax.lax.dot_general(q_h, k_t, (((1,), (1,)), ((), ())),
                                    preferred_element_type=f32)   # scale pre-folded
            m_new = jnp.maximum(m_i, jnp.max(s, axis=-1, keepdims=True))
            alpha = jnp.exp(m_i - m_new)
            p = jnp.exp(s - m_new)
            l_new = alpha * l_i + jnp.sum(p, axis=-1, keepdims=True)
            acc_new = alpha * acc + jnp.dot(p.astype(v_t.dtype), v_t,
                                            preferred_element_type=f32)
            return m_new, l_new, acc_new

        init = (jnp.full((tq, 1), -jnp.inf, f32),
                jnp.zeros((tq, 1), f32),
                jnp.zeros((tq, dh), f32))
        m_i, l_i, acc = jax.lax.fori_loop(0, num_kv_tiles, kv_step, init,
                                          unroll=(num_kv_tiles <= 8))
        # normalize and stash this head's output in VMEM scratch (bounds live ranges)
        o_scr[:, lo:lo + dh] = acc * pl.reciprocal(l_i, approx=True)

    o_all = o_scr[...]                             # (TQ, inner) f32
    mx = wo_ref.dtype

    if rotate_value:
        # rope^{-1}(O) @ Wo == (O*cos) @ Wo + (O*sin_swapped) @ (-(blockdiag(R) @ Wo))
        cos_t = cos_ref[0].astype(jnp.float32)
        sin_sw_t = sinsw_ref[0].astype(jnp.float32)
        out = jnp.dot((o_all * cos_t).astype(mx), wo_ref[...],
                      preferred_element_type=f32)
        out = out + jnp.dot((o_all * sin_sw_t).astype(mx), wo_rot_ref[...],
                            preferred_element_type=f32)
    else:
        out = jnp.dot(o_all.astype(mx), wo_ref[...], preferred_element_type=f32)

    o_ref[0] = (out + bo_ref[...].astype(f32)).astype(o_ref.dtype)


# ---------------------------------------------------------------------------
# Wrapper
# ---------------------------------------------------------------------------
def _default_vmem_limit_bytes():
    # ~96 MiB on v5e/v6e (128 MiB physical), ~48 MiB on v7x (64 MiB physical).
    try:
        cap = int(pltpu.get_tpu_info().vmem_capacity_bytes)
    except Exception:
        cap = 64 * 1024 * 1024   # conservative fallback (works on all generations)
    return max(min(cap - (16 << 20), 96 << 20), 32 << 20)


def rotary_self_attention(x, rotary_time_emb, params, *, heads, dim_head,
                          rotate_value, q_tile=None, kv_tile=None, proj_tile=None,
                          mxu_dtype=jnp.bfloat16, out_dtype=None):
    B, N, D = x.shape
    dh = dim_head
    inner = heads * dh
    assert dh % 2 == 0
    # NOTE: keep inner and D multiples of 128 (pad if needed) so HBM stores stay
    # lane-dense (unmasked vst) — the biggest measured lane-density lever.

    # v6e/v7x: 256(-512) row tiles fill the 256-wide MXU; v5e is already full at 128.
    q_tile = q_tile or min(N, 256)
    kv_tile = kv_tile or min(N, 256)
    proj_tile = proj_tile or min(N, 256)
    assert N % q_tile == 0 and N % kv_tile == 0 and N % proj_tile == 0

    f32 = jnp.float32
    out_dtype = out_dtype or x.dtype
    gamma = params["gamma"].reshape(1, D).astype(f32)
    beta = params["beta"].reshape(1, D).astype(f32)
    wqkv = params["wqkv"].astype(f32)              # (D, 3*inner), "x @ W" oriented
    wo_t = params["wo_t"].astype(f32)              # (inner, D)
    bo = params["bo"].reshape(1, D).astype(f32)

    # ---- fold rotate_half permutation + 1/sqrt(dh) scale into the weights ------
    scale = 1.0 / math.sqrt(dh)
    wq = wqkv[:, 0 * inner:1 * inner] * scale      # softmax scale folded into q cols
    wk = wqkv[:, 1 * inner:2 * inner]
    wv = wqkv[:, 2 * inner:3 * inner]

    def rotate_cols(w):            # w (D, inner) -> w @ blockdiag(R)
        wr = w.reshape(D, heads, dh // 2, 2)
        return jnp.stack([-wr[..., 1], wr[..., 0]], axis=-1).reshape(D, inner)

    parts = [wq, wk, wv, rotate_cols(wq), rotate_cols(wk)]
    if rotate_value:
        parts.append(rotate_cols(wv))
    w_all = jnp.concatenate(parts, axis=1).astype(mxu_dtype)   # (D, (5|6)*inner)
    wc = w_all.shape[1]

    wo = wo_t.astype(mxu_dtype)
    wo_rot = None
    if rotate_value:
        # -(blockdiag(R) @ Wo): row 2i <- -Wo[2i+1], row 2i+1 <- +Wo[2i]
        wr_ = wo_t.reshape(heads, dh // 2, 2, D)
        wo_rot = jnp.stack([-wr_[:, :, 1, :], wr_[:, :, 0, :]],
                           axis=2).reshape(inner, D).astype(mxu_dtype)

    # ---- precompute head-tiled trig once (wrapper), DMA'd into the kernels ----
    pos = rotary_time_emb.astype(f32)                               # (B, N, dh)
    cos_t = jnp.tile(jnp.cos(pos), (1, 1, heads)).astype(mxu_dtype)  # (B, N, inner)
    sin_t = jnp.tile(jnp.sin(pos), (1, 1, heads)).astype(mxu_dtype)
    sin_sw_t = None
    if rotate_value:
        pos_sw = pos.reshape(B, N, dh // 2, 2)[..., ::-1].reshape(B, N, dh)
        sin_sw_t = jnp.tile(jnp.sin(pos_sw), (1, 1, heads)).astype(mxu_dtype)

    buf1 = pl.Buffered(buffer_count=1)   # load-once / single-buffer constant blocks

    cparams = pltpu.CompilerParams(
        dimension_semantics=("parallel", "parallel"),
        vmem_limit_bytes=_default_vmem_limit_bytes())

    # ---- Kernel 1: LN + QKV + rope ---------------------------------------------
    k1 = functools.partial(_ln_qkv_rope_kernel, inner=inner,
                           rotate_value=rotate_value)
    q_r, k_r, v_r = pl.pallas_call(
        k1,
        out_shape=tuple(jax.ShapeDtypeStruct((B, N, inner), mxu_dtype)
                        for _ in range(3)),
        grid=(B, N // proj_tile),
        in_specs=[
            pl.BlockSpec((1, proj_tile, D), lambda b, n: (b, n, 0)),       # x (raw dtype)
            pl.BlockSpec((1, proj_tile, inner), lambda b, n: (b, n, 0)),   # cos (tiled)
            pl.BlockSpec((1, proj_tile, inner), lambda b, n: (b, n, 0)),   # sin (tiled)
            pl.BlockSpec((1, D), lambda b, n: (0, 0), pipeline_mode=buf1),  # gamma
            pl.BlockSpec((1, D), lambda b, n: (0, 0), pipeline_mode=buf1),  # beta
            pl.BlockSpec((D, wc), lambda b, n: (0, 0), pipeline_mode=buf1), # W_all
        ],
        out_specs=tuple(pl.BlockSpec((1, proj_tile, inner), lambda b, n: (b, n, 0))
                        for _ in range(3)),
        compiler_params=cparams,
    )(x, cos_t, sin_t, gamma, beta, w_all)

    # ---- Kernel 2: flash attention + fused out-proj -----------------------------
    k2 = functools.partial(_flash_attn_out_kernel, heads=heads, dim_head=dh,
                           kv_tile=kv_tile, rotate_value=rotate_value)

    in_specs = [
        pl.BlockSpec((1, q_tile, inner), lambda b, q: (b, q, 0)),            # q (roped)
        pl.BlockSpec((1, N, inner), lambda b, q: (b, 0, 0), pipeline_mode=buf1),  # k
        pl.BlockSpec((1, N, inner), lambda b, q: (b, 0, 0), pipeline_mode=buf1),  # v
    ]
    args = [q_r, k_r, v_r]
    if rotate_value:
        in_specs += [pl.BlockSpec((1, q_tile, inner), lambda b, q: (b, q, 0)),   # cos
                     pl.BlockSpec((1, q_tile, inner), lambda b, q: (b, q, 0))]   # sin_sw
        args += [cos_t, sin_sw_t]
    in_specs += [pl.BlockSpec((inner, D), lambda b, q: (0, 0), pipeline_mode=buf1)]  # Wo
    args += [wo]
    if rotate_value:
        in_specs += [pl.BlockSpec((inner, D), lambda b, q: (0, 0),
                                  pipeline_mode=buf1)]                           # -(R@Wo)
        args += [wo_rot]
    in_specs += [pl.BlockSpec((1, D), lambda b, q: (0, 0), pipeline_mode=buf1)]  # bias
    args += [bo]

    out = pl.pallas_call(
        k2,
        out_shape=jax.ShapeDtypeStruct((B, N, D), out_dtype),
        grid=(B, N // q_tile),
        in_specs=in_specs,
        out_specs=pl.BlockSpec((1, q_tile, D), lambda b, q: (b, q, 0)),
        scratch_shapes=[pltpu.VMEM((q_tile, inner), jnp.float32)],
        compiler_params=cparams,
    )(*args)

    return out


# ---------------------------------------------------------------------------
# Pure-JAX f32 reference (mirrors the PyTorch math backend, eval mode, no mask)
# ---------------------------------------------------------------------------
def _reference(x, pos, params, *, heads, dim_head, rotate_value):
    gamma, beta = params["gamma"], params["beta"]
    wqkv, wo_t, bo = params["wqkv"], params["wo_t"], params["bo"]
    hi = jax.lax.Precision.HIGHEST

    mu = x.mean(-1, keepdims=True)
    var = ((x - mu) ** 2).mean(-1, keepdims=True)
    xn = (x - mu) / jnp.sqrt(var + 1e-5) * gamma + beta

    qkv = jnp.dot(xn, wqkv, precision=hi)
    q, k, v = jnp.split(qkv, 3, axis=-1)
    B, N, _ = x.shape

    def to_heads(t):
        return t.reshape(B, N, heads, dim_head)

    q, k, v = to_heads(q), to_heads(k), to_heads(v)
    cos = jnp.cos(pos)[:, :, None, :]
    sin = jnp.sin(pos)[:, :, None, :]

    def rot_half(t):
        t2 = t.reshape(*t.shape[:-1], dim_head // 2, 2)
        x1, x2 = t2[..., 0], t2[..., 1]
        return jnp.stack((-x2, x1), axis=-1).reshape(t.shape)

    def rope(t, c, s):
        return t * c + rot_half(t) * s

    qr = rope(q, cos, sin)
    kr = rope(k, cos, sin)
    vr = rope(v, cos, sin) if rotate_value else v

    s_mat = jnp.einsum("bnhd,bmhd->bhnm", qr, kr, precision=hi) / math.sqrt(dim_head)
    p = jax.nn.softmax(s_mat, axis=-1)
    o = jnp.einsum("bhnm,bmhd->bnhd", p, vr, precision=hi)
    if rotate_value:
        o = rope(o, cos, -sin)
    o = o.reshape(B, N, heads * dim_head)
    return jnp.dot(o, wo_t, precision=hi) + bo


# ---------------------------------------------------------------------------
if __name__ == "__main__":
    # Small shapes chosen so inner == D == 128 -> lane-dense (unmasked) HBM stores,
    # while still exercising multi-head, q-tiling and multi-step online softmax.
    B, N, D = 2, 16, 128
    heads, dim_head = 4, 32
    inner = heads * dim_head

    key = jax.random.PRNGKey(0)
    kx, kp, kg, kb, kw1, kw2, kb2 = jax.random.split(key, 7)

    x = jax.random.normal(kx, (B, N, D), jnp.float32)
    rotary_time_emb = jax.random.uniform(kp, (B, N, dim_head), jnp.float32,
                                         minval=0.0, maxval=2.0 * math.pi)

    params = {
        "gamma": 1.0 + 0.1 * jax.random.normal(kg, (D,), jnp.float32),
        "beta": 0.1 * jax.random.normal(kb, (D,), jnp.float32),
        "wqkv": jax.random.normal(kw1, (D, 3 * inner), jnp.float32) / math.sqrt(D),
        "wo_t": jax.random.normal(kw2, (inner, D), jnp.float32) / math.sqrt(inner),
        "bo": 0.1 * jax.random.normal(kb2, (D,), jnp.float32),
    }

    for rotate_value in (False, True):
        fn = jax.jit(functools.partial(
            rotary_self_attention, heads=heads, dim_head=dim_head,
            rotate_value=rotate_value, q_tile=8, kv_tile=8, proj_tile=8))
        out = jax.block_until_ready(fn(x, rotary_time_emb, params))
        ref = _reference(x, rotary_time_emb, params, heads=heads,
                         dim_head=dim_head, rotate_value=rotate_value)
        # Kernel uses bf16 MXU operands / bf16 trig (f32 accumulation) + approx
        # reciprocal, so compare against exact f32 reference at bf16 tolerance.
        np.testing.assert_allclose(np.asarray(out), np.asarray(ref),
                                   rtol=8e-2, atol=8e-2)

    print("KERNEL_OK")
</pallas_src>

<mosaic_0001>
module attributes {stable_mosaic.version = 11 : i64} {
  func.func @_ln_qkv_rope_kernel(%arg0: i32, %arg1: i32, %arg2: memref<1x8x128xf32, #tpu.memory_space<vmem>>, %arg3: memref<1x8x128xbf16, #tpu.memory_space<vmem>>, %arg4: memref<1x8x128xbf16, #tpu.memory_space<vmem>>, %arg5: memref<1x128xf32, #tpu.memory_space<vmem>>, %arg6: memref<1x128xf32, #tpu.memory_space<vmem>>, %arg7: memref<128x640xbf16, #tpu.memory_space<vmem>>, %arg8: memref<1x8x128xbf16, #tpu.memory_space<vmem>>, %arg9: memref<1x8x128xbf16, #tpu.memory_space<vmem>>, %arg10: memref<1x8x128xbf16, #tpu.memory_space<vmem>>) attributes {dimension_semantics = [#tpu.dimension_semantics<parallel>, #tpu.dimension_semantics<parallel>], iteration_bounds = array<i64: 2, 2>, scalar_prefetch = 0 : i64, scratch_operands = 0 : i64, tpu.core_type = #tpu.core_type<tc>, window_params = [{transform_indices = @transform_0, window_bounds = array<i64: 1, 8, 128>}, {transform_indices = @transform_1, window_bounds = array<i64: 1, 8, 128>}, {transform_indices = @transform_2, window_bounds = array<i64: 1, 8, 128>}, {pipeline_mode = #tpu.pipeline_mode<synchronous>, transform_indices = @transform_3, window_bounds = array<i64: 1, 128>}, {pipeline_mode = #tpu.pipeline_mode<synchronous>, transform_indices = @transform_4, window_bounds = array<i64: 1, 128>}, {pipeline_mode = #tpu.pipeline_mode<synchronous>, transform_indices = @transform_5, window_bounds = array<i64: 128, 640>}, {transform_indices = @transform_6, window_bounds = array<i64: 1, 8, 128>}, {transform_indices = @transform_7, window_bounds = array<i64: 1, 8, 128>}, {transform_indices = @transform_8, window_bounds = array<i64: 1, 8, 128>}]} {
    %c0 = arith.constant 0 : index
    %c0_0 = arith.constant 0 : index
    %c0_1 = arith.constant 0 : index
    %0 = vector.load %arg2[%c0, %c0_0, %c0_1] : memref<1x8x128xf32, #tpu.memory_space<vmem>>, vector<1x8x128xf32>
    %1 = vector.shape_cast %0 : vector<1x8x128xf32> to vector<8x128xf32>
    %cst = arith.constant dense<0.000000e+00> : vector<8xf32>
    %2 = vector.multi_reduction <add>, %1, %cst [1] : vector<8x128xf32> to vector<8xf32>
    %3 = vector.shape_cast %2 : vector<8xf32> to vector<8x1xf32>
    %cst_2 = arith.constant 1.280000e+02 : f32
    %4 = vector.broadcast %cst_2 : f32 to vector<8x1xf32>
    %5 = arith.divf %3, %4 : vector<8x1xf32>
    %6 = vector.broadcast %5 : vector<8x1xf32> to vector<8x128xf32>
    %7 = arith.subf %1, %6 : vector<8x128xf32>
    %8 = arith.mulf %7, %7 : vector<8x128xf32>
    %cst_3 = arith.constant dense<0.000000e+00> : vector<8xf32>
    %9 = vector.multi_reduction <add>, %8, %cst_3 [1] : vector<8x128xf32> to vector<8xf32>
    %10 = vector.shape_cast %9 : vector<8xf32> to vector<8x1xf32>
    %cst_4 = arith.constant 1.280000e+02 : f32
    %11 = vector.broadcast %cst_4 : f32 to vector<8x1xf32>
    %12 = arith.divf %10, %11 : vector<8x1xf32>
    %cst_5 = arith.constant 9.99999974E-6 : f32
    %13 = vector.broadcast %cst_5 : f32 to vector<8x1xf32>
    %14 = arith.addf %12, %13 : vector<8x1xf32>
    %15 = math.rsqrt %14 : vector<8x1xf32>
    %16 = vector.broadcast %15 : vector<8x1xf32> to vector<8x128xf32>
    %17 = arith.mulf %7, %16 : vector<8x128xf32>
    %c0_6 = arith.constant 0 : index
    %c0_7 = arith.constant 0 : index
    %18 = vector.load %arg5[%c0_6, %c0_7] : memref<1x128xf32, #tpu.memory_space<vmem>>, vector<1x128xf32>
    %19 = vector.broadcast %18 : vector<1x128xf32> to vector<8x128xf32>
    %20 = arith.mulf %17, %19 : vector<8x128xf32>
    %c0_8 = arith.constant 0 : index
    %c0_9 = arith.constant 0 : index
    %21 = vector.load %arg6[%c0_8, %c0_9] : memref<1x128xf32, #tpu.memory_space<vmem>>, vector<1x128xf32>
    %22 = vector.broadcast %21 : vector<1x128xf32> to vector<8x128xf32>
    %23 = arith.addf %20, %22 : vector<8x128xf32>
    %24 = arith.truncf %23 : vector<8x128xf32> to vector<8x128xbf16>
    %c0_10 = arith.constant 0 : index
    %c0_11 = arith.constant 0 : index
    %25 = vector.load %arg7[%c0_10, %c0_11] : memref<128x640xbf16, #tpu.memory_space<vmem>>, vector<128x640xbf16>
    %cst_12 = arith.constant dense<0.000000e+00> : vector<8x640xf32>
    %26 = tpu.matmul %24, %25, %cst_12 {dimension_numbers = #tpu.dot_dimension_numbers<[1], [0], [0], [1], [0, 0, 1, 1], [], []>} : vector<8x128xbf16>, vector<128x640xbf16>, vector<8x640xf32> -> vector<8x640xf32>
    %c0_13 = arith.constant 0 : index
    %c0_14 = arith.constant 0 : index
    %c0_15 = arith.constant 0 : index
    %27 = vector.load %arg3[%c0_13, %c0_14, %c0_15] : memref<1x8x128xbf16, #tpu.memory_space<vmem>>, vector<1x8x128xbf16>
    %28 = vector.shape_cast %27 : vector<1x8x128xbf16> to vector<8x128xbf16>
    %29 = arith.extf %28 : vector<8x128xbf16> to vector<8x128xf32>
    %c0_16 = arith.constant 0 : index
    %c0_17 = arith.constant 0 : index
    %c0_18 = arith.constant 0 : index
    %30 = vector.load %arg4[%c0_16, %c0_17, %c0_18] : memref<1x8x128xbf16, #tpu.memory_space<vmem>>, vector<1x8x128xbf16>
    %31 = vector.shape_cast %30 : vector<1x8x128xbf16> to vector<8x128xbf16>
    %32 = arith.extf %31 : vector<8x128xbf16> to vector<8x128xf32>
    %33 = vector.extract_strided_slice %26 {offsets = [0, 0], sizes = [8, 128], strides = [1, 1]} : vector<8x640xf32> to vector<8x128xf32>
    %34 = vector.extract_strided_slice %26 {offsets = [0, 128], sizes = [8, 128], strides = [1, 1]} : vector<8x640xf32> to vector<8x128xf32>
    %35 = vector.extract_strided_slice %26 {offsets = [0, 256], sizes = [8, 128], strides = [1, 1]} : vector<8x640xf32> to vector<8x128xf32>
    %36 = vector.extract_strided_slice %26 {offsets = [0, 384], sizes = [8, 128], strides = [1, 1]} : vector<8x640xf32> to vector<8x128xf32>
    %37 = vector.extract_strided_slice %26 {offsets = [0, 512], sizes = [8, 128], strides = [1, 1]} : vector<8x640xf32> to vector<8x128xf32>
    %38 = arith.mulf %33, %29 : vector<8x128xf32>
    %39 = arith.mulf %36, %32 : vector<8x128xf32>
    %40 = arith.addf %38, %39 : vector<8x128xf32>
    %41 = arith.truncf %40 : vector<8x128xf32> to vector<8x128xbf16>
    %c0_19 = arith.constant 0 : index
    %c0_20 = arith.constant 0 : index
    %c0_21 = arith.constant 0 : index
    %42 = vector.load %arg8[%c0_19, %c0_20, %c0_21] : memref<1x8x128xbf16, #tpu.memory_space<vmem>>, vector<1x8x128xbf16>
    %43 = vector.shape_cast %42 : vector<1x8x128xbf16> to vector<8x128xbf16>
    %44 = vector.shape_cast %41 : vector<8x128xbf16> to vector<1x8x128xbf16>
    tpu.vector_store %arg8[%c0_19, %c0_20, %c0_21], %44 {strides = array<i32>} : memref<1x8x128xbf16, #tpu.memory_space<vmem>>, vector<1x8x128xbf16>,
    %45 = arith.mulf %34, %29 : vector<8x128xf32>
    %46 = arith.mulf %37, %32 : vector<8x128xf32>
    %47 = arith.addf %45, %46 : vector<8x128xf32>
    %48 = arith.truncf %47 : vector<8x128xf32> to vector<8x128xbf16>
    %c0_22 = arith.constant 0 : index
    %c0_23 = arith.constant 0 : index
    %c0_24 = arith.constant 0 : index
    %49 = vector.load %arg9[%c0_22, %c0_23, %c0_24] : memref<1x8x128xbf16, #tpu.memory_space<vmem>>, vector<1x8x128xbf16>
    %50 = vector.shape_cast %49 : vector<1x8x128xbf16> to vector<8x128xbf16>
    %51 = vector.shape_cast %48 : vector<8x128xbf16> to vector<1x8x128xbf16>
    tpu.vector_store %arg9[%c0_22, %c0_23, %c0_24], %51 {strides = array<i32>} : memref<1x8x128xbf16, #tpu.memory_space<vmem>>, vector<1x8x128xbf16>,
    %52 = arith.truncf %35 : vector<8x128xf32> to vector<8x128xbf16>
    %c0_25 = arith.constant 0 : index
    %c0_26 = arith.constant 0 : index
    %c0_27 = arith.constant 0 : index
    %53 = vector.load %arg10[%c0_25, %c0_26, %c0_27] : memref<1x8x128xbf16, #tpu.memory_space<vmem>>, vector<1x8x128xbf16>
    %54 = vector.shape_cast %53 : vector<1x8x128xbf16> to vector<8x128xbf16>
    %55 = vector.shape_cast %52 : vector<8x128xbf16> to vector<1x8x128xbf16>
    tpu.vector_store %arg10[%c0_25, %c0_26, %c0_27], %55 {strides = array<i32>} : memref<1x8x128xbf16, #tpu.memory_space<vmem>>, vector<1x8x128xbf16>,
    return
  }
  func.func @transform_0(%arg0: i32, %arg1: i32) -> (i32, i32, i32) {
    %c0_i32 = arith.constant 0 : i32
    %c0_i32_0 = arith.constant 0 : i32
    return %arg0, %arg1, %c0_i32 : i32, i32, i32
  }
  func.func @transform_1(%arg0: i32, %arg1: i32) -> (i32, i32, i32) {
    %c0_i32 = arith.constant 0 : i32
    %c0_i32_0 = arith.constant 0 : i32
    return %arg0, %arg1, %c0_i32 : i32, i32, i32
  }
  func.func @transform_2(%arg0: i32, %arg1: i32) -> (i32, i32, i32) {
    %c0_i32 = arith.constant 0 : i32
    %c0_i32_0 = arith.constant 0 : i32
    return %arg0, %arg1, %c0_i32 : i32, i32, i32
  }
  func.func @transform_3(%arg0: i32, %arg1: i32) -> (i32, i32) {
    %c0_i32 = arith.constant 0 : i32
    %c0_i32_0 = arith.constant 0 : i32
    %c0_i32_1 = arith.constant 0 : i32
    return %c0_i32, %c0_i32_0 : i32, i32
  }
  func.func @transform_4(%arg0: i32, %arg1: i32) -> (i32, i32) {
    %c0_i32 = arith.constant 0 : i32
    %c0_i32_0 = arith.constant 0 : i32
    %c0_i32_1 = arith.constant 0 : i32
    return %c0_i32, %c0_i32_0 : i32, i32
  }
  func.func @transform_5(%arg0: i32, %arg1: i32) -> (i32, i32) {
    %c0_i32 = arith.constant 0 : i32
    %c0_i32_0 = arith.constant 0 : i32
    %c0_i32_1 = arith.constant 0 : i32
    return %c0_i32, %c0_i32_0 : i32, i32
  }
  func.func @transform_6(%arg0: i32, %arg1: i32) -> (i32, i32, i32) {
    %c0_i32 = arith.constant 0 : i32
    %c0_i32_0 = arith.constant 0 : i32
    return %arg0, %arg1, %c0_i32 : i32, i32, i32
  }
  func.func @transform_7(%arg0: i32, %arg1: i32) -> (i32, i32, i32) {
    %c0_i32 = arith.constant 0 : i32
    %c0_i32_0 = arith.constant 0 : i32
    return %arg0, %arg1, %c0_i32 : i32, i32, i32
  }
  func.func @transform_8(%arg0: i32, %arg1: i32) -> (i32, i32, i32) {
    %c0_i32 = arith.constant 0 : i32
    %c0_i32_0 = arith.constant 0 : i32
    return %arg0, %arg1, %c0_i32 : i32, i32, i32
  }
}

module attributes {stable_mosaic.version = 11 : i64} {
  func.func @_flash_attn_out_kernel(%arg0: i32, %arg1: i32, %arg2: memref<1x8x128xbf16, #tpu.memory_space<vmem>>, %arg3: memref<1x16x128xbf16, #tpu.memory_space<vmem>>, %arg4: memref<1x16x128xbf16, #tpu.memory_space<vmem>>, %arg5: memref<128x128xbf16, #tpu.memory_space<vmem>>, %arg6: memref<1x128xf32, #tpu.memory_space<vmem>>, %arg7: memref<1x8x128xf32, #tpu.memory_space<vmem>>, %arg8: memref<8x128xf32, #tpu.memory_space<vmem>>) attributes {dimension_semantics = [#tpu.dimension_semantics<parallel>, #tpu.dimension_semantics<parallel>], iteration_bounds = array<i64: 2, 2>, scalar_prefetch = 0 : i64, scratch_operands = 1 : i64, tpu.core_type = #tpu.core_type<tc>, window_params = [{transform_indices = @transform_0, window_bounds = array<i64: 1, 8, 128>}, {pipeline_mode = #tpu.pipeline_mode<synchronous>, transform_indices = @transform_1, window_bounds = array<i64: 1, 16, 128>}, {pipeline_mode = #tpu.pipeline_mode<synchronous>, transform_indices = @transform_2, window_bounds = array<i64: 1, 16, 128>}, {pipeline_mode = #tpu.pipeline_mode<synchronous>, transform_indices = @transform_3, window_bounds = array<i64: 128, 128>}, {pipeline_mode = #tpu.pipeline_mode<synchronous>, transform_indices = @transform_4, window_bounds = array<i64: 1, 128>}, {transform_indices = @transform_5, window_bounds = array<i64: 1, 8, 128>}]} {
    %c0 = arith.constant 0 : index
    %c0_0 = arith.constant 0 : index
    %c0_1 = arith.constant 0 : index
    %0 = vector.load %arg2[%c0, %c0_0, %c0_1] : memref<1x8x128xbf16, #tpu.memory_space<vmem>>, vector<1x8x128xbf16>
    %1 = vector.shape_cast %0 : vector<1x8x128xbf16> to vector<8x128xbf16>
    %2 = vector.extract_strided_slice %1 {offsets = [0, 0], sizes = [8, 32], strides = [1, 1]} : vector<8x128xbf16> to vector<8x32xbf16>
    %cst = arith.constant 0xFF800000 : f32
    %3 = vector.broadcast %cst : f32 to vector<8x1xf32>
    %cst_2 = arith.constant 0.000000e+00 : f32
    %4 = vector.broadcast %cst_2 : f32 to vector<8x1xf32>
    %cst_3 = arith.constant 0.000000e+00 : f32
    %5 = vector.broadcast %cst_3 : f32 to vector<8x32xf32>
    %c0_i32 = arith.constant 0 : i32
    %c8_i32 = arith.constant 8 : i32
    %6 = arith.muli %c0_i32, %c8_i32 : i32
    %7 = tpu.assume_multiple %6, 8 : i32
    %c0_4 = arith.constant 0 : index
    %8 = arith.index_cast %7 : i32 to index
    %c0_5 = arith.constant 0 : index
    %9 = vector.load %arg3[%c0_4, %8, %c0_5] : memref<1x16x128xbf16, #tpu.memory_space<vmem>>, vector<1x8x32xbf16>
    %10 = vector.shape_cast %9 : vector<1x8x32xbf16> to vector<8x32xbf16>
    %c0_6 = arith.constant 0 : index
    %11 = arith.index_cast %7 : i32 to index
    %c0_7 = arith.constant 0 : index
    %12 = vector.load %arg4[%c0_6, %11, %c0_7] : memref<1x16x128xbf16, #tpu.memory_space<vmem>>, vector<1x8x32xbf16>
    %13 = vector.shape_cast %12 : vector<1x8x32xbf16> to vector<8x32xbf16>
    %cst_8 = arith.constant dense<0.000000e+00> : vector<8x8xf32>
    %14 = tpu.matmul %2, %10, %cst_8 {dimension_numbers = #tpu.dot_dimension_numbers<[1], [1], [0], [0], [0, 0, 1, 0], [], []>} : vector<8x32xbf16>, vector<8x32xbf16>, vector<8x8xf32> -> vector<8x8xf32>
    %cst_9 = arith.constant dense<0xFF800000> : vector<8xf32>
    %15 = vector.multi_reduction <maximumf>, %14, %cst_9 [1] : vector<8x8xf32> to vector<8xf32>
    %16 = vector.shape_cast %15 : vector<8xf32> to vector<8x1xf32>
    %17 = arith.maximumf %3, %16 : vector<8x1xf32>
    %18 = arith.subf %3, %17 : vector<8x1xf32>
    %19 = math.exp %18 : vector<8x1xf32>
    %20 = vector.broadcast %17 : vector<8x1xf32> to vector<8x8xf32>
    %21 = arith.subf %14, %20 : vector<8x8xf32>
    %22 = math.exp %21 : vector<8x8xf32>
    %23 = arith.mulf %19, %4 : vector<8x1xf32>
    %cst_10 = arith.constant dense<0.000000e+00> : vector<8xf32>
    %24 = vector.multi_reduction <add>, %22, %cst_10 [1] : vector<8x8xf32> to vector<8xf32>
    %25 = vector.shape_cast %24 : vector<8xf32> to vector<8x1xf32>
    %26 = arith.addf %23, %25 : vector<8x1xf32>
    %27 = vector.broadcast %19 : vector<8x1xf32> to vector<8x32xf32>
    %28 = arith.mulf %27, %5 : vector<8x32xf32>
    %29 = arith.truncf %22 : vector<8x8xf32> to vector<8x8xbf16>
    %cst_11 = arith.constant dense<0.000000e+00> : vector<8x32xf32>
    %30 = tpu.matmul %29, %13, %cst_11 {dimension_numbers = #tpu.dot_dimension_numbers<[1], [0], [0], [1], [0, 0, 1, 1], [], []>} : vector<8x8xbf16>, vector<8x32xbf16>, vector<8x32xf32> -> vector<8x32xf32>
    %31 = arith.addf %28, %30 : vector<8x32xf32>
    %c1_i32 = arith.constant 1 : i32
    %c8_i32_12 = arith.constant 8 : i32
    %32 = arith.muli %c1_i32, %c8_i32_12 : i32
    %33 = tpu.assume_multiple %32, 8 : i32
    %c0_13 = arith.constant 0 : index
    %34 = arith.index_cast %33 : i32 to index
    %c0_14 = arith.constant 0 : index
    %35 = vector.load %arg3[%c0_13, %34, %c0_14] : memref<1x16x128xbf16, #tpu.memory_space<vmem>>, vector<1x8x32xbf16>
    %36 = vector.shape_cast %35 : vector<1x8x32xbf16> to vector<8x32xbf16>
    %c0_15 = arith.constant 0 : index
    %37 = arith.index_cast %33 : i32 to index
    %c0_16 = arith.constant 0 : index
    %38 = vector.load %arg4[%c0_15, %37, %c0_16] : memref<1x16x128xbf16, #tpu.memory_space<vmem>>, vector<1x8x32xbf16>
    %39 = vector.shape_cast %38 : vector<1x8x32xbf16> to vector<8x32xbf16>
    %cst_17 = arith.constant dense<0.000000e+00> : vector<8x8xf32>
    %40 = tpu.matmul %2, %36, %cst_17 {dimension_numbers = #tpu.dot_dimension_numbers<[1], [1], [0], [0], [0, 0, 1, 0], [], []>} : vector<8x32xbf16>, vector<8x32xbf16>, vector<8x8xf32> -> vector<8x8xf32>
    %cst_18 = arith.constant dense<0xFF800000> : vector<8xf32>
    %41 = vector.multi_reduction <maximumf>, %40, %cst_18 [1] : vector<8x8xf32> to vector<8xf32>
    %42 = vector.shape_cast %41 : vector<8xf32> to vector<8x1xf32>
    %43 = arith.maximumf %17, %42 : vector<8x1xf32>
    %44 = arith.subf %17, %43 : vector<8x1xf32>
    %45 = math.exp %44 : vector<8x1xf32>
    %46 = vector.broadcast %43 : vector<8x1xf32> to vector<8x8xf32>
    %47 = arith.subf %40, %46 : vector<8x8xf32>
    %48 = math.exp %47 : vector<8x8xf32>
    %49 = arith.mulf %45, %26 : vector<8x1xf32>
    %cst_19 = arith.constant dense<0.000000e+00> : vector<8xf32>
    %50 = vector.multi_reduction <add>, %48, %cst_19 [1] : vector<8x8xf32> to vector<8xf32>
    %51 = vector.shape_cast %50 : vector<8xf32> to vector<8x1xf32>
    %52 = arith.addf %49, %51 : vector<8x1xf32>
    %53 = vector.broadcast %45 : vector<8x1xf32> to vector<8x32xf32>
    %54 = arith.mulf %53, %31 : vector<8x32xf32>
    %55 = arith.truncf %48 : vector<8x8xf32> to vector<8x8xbf16>
    %cst_20 = arith.constant dense<0.000000e+00> : vector<8x32xf32>
    %56 = tpu.matmul %55, %39, %cst_20 {dimension_numbers = #tpu.dot_dimension_numbers<[1], [0], [0], [1], [0, 0, 1, 1], [], []>} : vector<8x8xbf16>, vector<8x32xbf16>, vector<8x32xf32> -> vector<8x32xf32>
    %57 = arith.addf %54, %56 : vector<8x32xf32>
    %c2_i32 = arith.constant 2 : i32
    %58 = tpu.reciprocal %52 {approx = true} : vector<8x1xf32> -> vector<8x1xf32>
    %59 = vector.broadcast %58 : vector<8x1xf32> to vector<8x32xf32>
    %60 = arith.mulf %57, %59 : vector<8x32xf32>
    %c0_21 = arith.constant 0 : index
    %c0_22 = arith.constant 0 : index
    %61 = vector.load %arg8[%c0_21, %c0_22] : memref<8x128xf32, #tpu.memory_space<vmem>>, vector<8x32xf32>
    tpu.vector_store %arg8[%c0_21, %c0_22], %60 {strides = array<i32>} : memref<8x128xf32, #tpu.memory_space<vmem>>, vector<8x32xf32>,
    %62 = vector.extract_strided_slice %1 {offsets = [0, 32], sizes = [8, 32], strides = [1, 1]} : vector<8x128xbf16> to vector<8x32xbf16>
    %cst_23 = arith.constant 0xFF800000 : f32
    %63 = vector.broadcast %cst_23 : f32 to vector<8x1xf32>
    %cst_24 = arith.constant 0.000000e+00 : f32
    %64 = vector.broadcast %cst_24 : f32 to vector<8x1xf32>
    %cst_25 = arith.constant 0.000000e+00 : f32
    %65 = vector.broadcast %cst_25 : f32 to vector<8x32xf32>
    %c0_i32_26 = arith.constant 0 : i32
    %c8_i32_27 = arith.constant 8 : i32
    %66 = arith.muli %c0_i32_26, %c8_i32_27 : i32
    %67 = tpu.assume_multiple %66, 8 : i32
    %c0_28 = arith.constant 0 : index
    %68 = arith.index_cast %67 : i32 to index
    %c32 = arith.constant 32 : index
    %69 = vector.load %arg3[%c0_28, %68, %c32] : memref<1x16x128xbf16, #tpu.memory_space<vmem>>, vector<1x8x32xbf16>
    %70 = vector.shape_cast %69 : vector<1x8x32xbf16> to vector<8x32xbf16>
    %c0_29 = arith.constant 0 : index
    %71 = arith.index_cast %67 : i32 to index
    %c32_30 = arith.constant 32 : index
    %72 = vector.load %arg4[%c0_29, %71, %c32_30] : memref<1x16x128xbf16, #tpu.memory_space<vmem>>, vector<1x8x32xbf16>
    %73 = vector.shape_cast %72 : vector<1x8x32xbf16> to vector<8x32xbf16>
    %cst_31 = arith.constant dense<0.000000e+00> : vector<8x8xf32>
    %74 = tpu.matmul %62, %70, %cst_31 {dimension_numbers = #tpu.dot_dimension_numbers<[1], [1], [0], [0], [0, 0, 1, 0], [], []>} : vector<8x32xbf16>, vector<8x32xbf16>, vector<8x8xf32> -> vector<8x8xf32>
    %cst_32 = arith.constant dense<0xFF800000> : vector<8xf32>
    %75 = vector.multi_reduction <maximumf>, %74, %cst_32 [1] : vector<8x8xf32> to vector<8xf32>
    %76 = vector.shape_cast %75 : vector<8xf32> to vector<8x1xf32>
    %77 = arith.maximumf %63, %76 : vector<8x1xf32>
    %78 = arith.subf %63, %77 : vector<8x1xf32>
    %79 = math.exp %78 : vector<8x1xf32>
    %80 = vector.broadcast %77 : vector<8x1xf32> to vector<8x8xf32>
    %81 = arith.subf %74, %80 : vector<8x8xf32>
    %82 = math.exp %81 : vector<8x8xf32>
    %83 = arith.mulf %79, %64 : vector<8x1xf32>
    %cst_33 = arith.constant dense<0.000000e+00> : vector<8xf32>
    %84 = vector.multi_reduction <add>, %82, %cst_33 [1] : vector<8x8xf32> to vector<8xf32>
    %85 = vector.shape_cast %84 : vector<8xf32> to vector<8x1xf32>
    %86 = arith.addf %83, %85 : vector<8x1xf32>
    %87 = vector.broadcast %79 : vector<8x1xf32> to vector<8x32xf32>
    %88 = arith.mulf %87, %65 : vector<8x32xf32>
    %89 = arith.truncf %82 : vector<8x8xf32> to vector<8x8xbf16>
    %cst_34 = arith.constant dense<0.000000e+00> : vector<8x32xf32>
    %90 = tpu.matmul %89, %73, %cst_34 {dimension_numbers = #tpu.dot_dimension_numbers<[1], [0], [0], [1], [0, 0, 1, 1], [], []>} : vector<8x8xbf16>, vector<8x32xbf16>, vector<8x32xf32> -> vector<8x32xf32>
    %91 = arith.addf %88, %90 : vector<8x32xf32>
    %c1_i32_35 = arith.constant 1 : i32
    %c8_i32_36 = arith.constant 8 : i32
    %92 = arith.muli %c1_i32_35, %c8_i32_36 : i32
    %93 = tpu.assume_multiple %92, 8 : i32
    %c0_37 = arith.constant 0 : index
    %94 = arith.index_cast %93 : i32 to index
    %c32_38 = arith.constant 32 : index
    %95 = vector.load %arg3[%c0_37, %94, %c32_38] : memref<1x16x128xbf16, #tpu.memory_space<vmem>>, vector<1x8x32xbf16>
    %96 = vector.shape_cast %95 : vector<1x8x32xbf16> to vector<8x32xbf16>
    %c0_39 = arith.constant 0 : index
    %97 = arith.index_cast %93 : i32 to index
    %c32_40 = arith.constant 32 : index
    %98 = vector.load %arg4[%c0_39, %97, %c32_40] : memref<1x16x128xbf16, #tpu.memory_space<vmem>>, vector<1x8x32xbf16>
    %99 = vector.shape_cast %98 : vector<1x8x32xbf16> to vector<8x32xbf16>
    %cst_41 = arith.constant dense<0.000000e+00> : vector<8x8xf32>
    %100 = tpu.matmul %62, %96, %cst_41 {dimension_numbers = #tpu.dot_dimension_numbers<[1], [1], [0], [0], [0, 0, 1, 0], [], []>} : vector<8x32xbf16>, vector<8x32xbf16>, vector<8x8xf32> -> vector<8x8xf32>
    %cst_42 = arith.constant dense<0xFF800000> : vector<8xf32>
    %101 = vector.multi_reduction <maximumf>, %100, %cst_42 [1] : vector<8x8xf32> to vector<8xf32>
    %102 = vector.shape_cast %101 : vector<8xf32> to vector<8x1xf32>
    %103 = arith.maximumf %77, %102 : vector<8x1xf32>
    %104 = arith.subf %77, %103 : vector<8x1xf32>
    %105 = math.exp %104 : vector<8x1xf32>
    %106 = vector.broadcast %103 : vector<8x1xf32> to vector<8x8xf32>
    %107 = arith.subf %100, %106 : vector<8x8xf32>
    %108 = math.exp %107 : vector<8x8xf32>
    %109 = arith.mulf %105, %86 : vector<8x1xf32>
    %cst_43 = arith.constant dense<0.000000e+00> : vector<8xf32>
    %110 = vector.multi_reduction <add>, %108, %cst_43 [1] : vector<8x8xf32> to vector<8xf32>
    %111 = vector.shape_cast %110 : vector<8xf32> to vector<8x1xf32>
    %112 = arith.addf %109, %111 : vector<8x1xf32>
    %113 = vector.broadcast %105 : vector<8x1xf32> to vector<8x32xf32>
    %114 = arith.mulf %113, %91 : vector<8x32xf32>
    %115 = arith.truncf %108 : vector<8x8xf32> to vector<8x8xbf16>
    %cst_44 = arith.constant dense<0.000000e+00> : vector<8x32xf32>
    %116 = tpu.matmul %115, %99, %cst_44 {dimension_numbers = #tpu.dot_dimension_numbers<[1], [0], [0], [1], [0, 0, 1, 1], [], []>} : vector<8x8xbf16>, vector<8x32xbf16>, vector<8x32xf32> -> vector<8x32xf32>
    %117 = arith.addf %114, %116 : vector<8x32xf32>
    %c2_i32_45 = arith.constant 2 : i32
    %118 = tpu.reciprocal %112 {approx = true} : vector<8x1xf32> -> vector<8x1xf32>
    %119 = vector.broadcast %118 : vector<8x1xf32> to vector<8x32xf32>
    %120 = arith.mulf %117, %119 : vector<8x32xf32>
    %c0_46 = arith.constant 0 : index
    %c32_47 = arith.constant 32 : index
    %121 = vector.load %arg8[%c0_46, %c32_47] : memref<8x128xf32, #tpu.memory_space<vmem>>, vector<8x32xf32>
    tpu.vector_store %arg8[%c0_46, %c32_47], %120 {strides = array<i32>} : memref<8x128xf32, #tpu.memory_space<vmem>>, vector<8x32xf32>,
    %122 = vector.extract_strided_slice %1 {offsets = [0, 64], sizes = [8, 32], strides = [1, 1]} : vector<8x128xbf16> to vector<8x32xbf16>
    %cst_48 = arith.constant 0xFF800000 : f32
    %123 = vector.broadcast %cst_48 : f32 to vector<8x1xf32>
    %cst_49 = arith.constant 0.000000e+00 : f32
    %124 = vector.broadcast %cst_49 : f32 to vector<8x1xf32>
    %cst_50 = arith.constant 0.000000e+00 : f32
    %125 = vector.broadcast %cst_50 : f32 to vector<8x32xf32>
    %c0_i32_51 = arith.constant 0 : i32
    %c8_i32_52 = arith.constant 8 : i32
    %126 = arith.muli %c0_i32_51, %c8_i32_52 : i32
    %127 = tpu.assume_multiple %126, 8 : i32
    %c0_53 = arith.constant 0 : index
    %128 = arith.index_cast %127 : i32 to index
    %c64 = arith.constant 64 : index
    %129 = vector.load %arg3[%c0_53, %128, %c64] : memref<1x16x128xbf16, #tpu.memory_space<vmem>>, vector<1x8x32xbf16>
    %130 = vector.shape_cast %129 : vector<1x8x32xbf16> to vector<8x32xbf16>
    %c0_54 = arith.constant 0 : index
    %131 = arith.index_cast %127 : i32 to index
    %c64_55 = arith.constant 64 : index
    %132 = vector.load %arg4[%c0_54, %131, %c64_55] : memref<1x16x128xbf16, #tpu.memory_space<vmem>>, vector<1x8x32xbf16>
    %133 = vector.shape_cast %132 : vector<1x8x32xbf16> to vector<8x32xbf16>
    %cst_56 = arith.constant dense<0.000000e+00> : vector<8x8xf32>
    %134 = tpu.matmul %122, %130, %cst_56 {dimension_numbers = #tpu.dot_dimension_numbers<[1], [1], [0], [0], [0, 0, 1, 0], [], []>} : vector<8x32xbf16>, vector<8x32xbf16>, vector<8x8xf32> -> vector<8x8xf32>
    %cst_57 = arith.constant dense<0xFF800000> : vector<8xf32>
    %135 = vector.multi_reduction <maximumf>, %134, %cst_57 [1] : vector<8x8xf32> to vector<8xf32>
    %136 = vector.shape_cast %135 : vector<8xf32> to vector<8x1xf32>
    %137 = arith.maximumf %123, %136 : vector<8x1xf32>
    %138 = arith.subf %123, %137 : vector<8x1xf32>
    %139 = math.exp %138 : vector<8x1xf32>
    %140 = vector.broadcast %137 : vector<8x1xf32> to vector<8x8xf32>
    %141 = arith.subf %134, %140 : vector<8x8xf32>
    %142 = math.exp %141 : vector<8x8xf32>
    %143 = arith.mulf %139, %124 : vector<8x1xf32>
    %cst_58 = arith.constant dense<0.000000e+00> : vector<8xf32>
    %144 = vector.multi_reduction <add>, %142, %cst_58 [1] : vector<8x8xf32> to vector<8xf32>
    %145 = vector.shape_cast %144 : vector<8xf32> to vector<8x1xf32>
    %146 = arith.addf %143, %145 : vector<8x1xf32>
    %147 = vector.broadcast %139 : vector<8x1xf32> to vector<8x32xf32>
    %148 = arith.mulf %147, %125 : vector<8x32xf32>
    %149 = arith.truncf %142 : vector<8x8xf32> to vector<8x8xbf16>
    %cst_59 = arith.constant dense<0.000000e+00> : vector<8x32xf32>
    %150 = tpu.matmul %149, %133, %cst_59 {dimension_numbers = #tpu.dot_dimension_numbers<[1], [0], [0], [1], [0, 0, 1, 1], [], []>} : vector<8x8xbf16>, vector<8x32xbf16>, vector<8x32xf32> -> vector<8x32xf32>
    %151 = arith.addf %148, %150 : vector<8x32xf32>
    %c1_i32_60 = arith.constant 1 : i32
    %c8_i32_61 = arith.constant 8 : i32
    %152 = arith.muli %c1_i32_60, %c8_i32_61 : i32
    %153 = tpu.assume_multiple %152, 8 : i32
    %c0_62 = arith.constant 0 : index
    %154 = arith.index_cast %153 : i32 to index
    %c64_63 = arith.constant 64 : index
    %155 = vector.load %arg3[%c0_62, %154, %c64_63] : memref<1x16x128xbf16, #tpu.memory_space<vmem>>, vector<1x8x32xbf16>
    %156 = vector.shape_cast %155 : vector<1x8x32xbf16> to vector<8x32xbf16>
    %c0_64 = arith.constant 0 : index
    %157 = arith.index_cast %153 : i32 to index
    %c64_65 = arith.constant 64 : index
    %158 = vector.load %arg4[%c0_64, %157, %c64_65] : memref<1x16x128xbf16, #tpu.memory_space<vmem>>, vector<1x8x32xbf16>
    %159 = vector.shape_cast %158 : vector<1x8x32xbf16> to vector<8x32xbf16>
    %cst_66 = arith.constant dense<0.000000e+00> : vector<8x8xf32>
    %160 = tpu.matmul %122, %156, %cst_66 {dimension_numbers = #tpu.dot_dimension_numbers<[1], [1], [0], [0], [0, 0, 1, 0], [], []>} : vector<8x32xbf16>, vector<8x32xbf16>, vector<8x8xf32> -> vector<8x8xf32>
    %cst_67 = arith.constant dense<0xFF800000> : vector<8xf32>
    %161 = vector.multi_reduction <maximumf>, %160, %cst_67 [1] : vector<8x8xf32> to vector<8xf32>
    %162 = vector.shape_cast %161 : vector<8xf32> to vector<8x1xf32>
    %163 = arith.maximumf %137, %162 : vector<8x1xf32>
    %164 = arith.subf %137, %163 : vector<8x1xf32>
    %165 = math.exp %164 : vector<8x1xf32>
    %166 = vector.broadcast %163 : vector<8x1xf32> to vector<8x8xf32>
    %167 = arith.subf %160, %166 : vector<8x8xf32>
    %168 = math.exp %167 : vector<8x8xf32>
    %169 = arith.mulf %165, %146 : vector<8x1xf32>
    %cst_68 = arith.constant dense<0.000000e+00> : vector<8xf32>
    %170 = vector.multi_reduction <add>, %168, %cst_68 [1] : vector<8x8xf32> to vector<8xf32>
    %171 = vector.shape_cast %170 : vector<8xf32> to vector<8x1xf32>
    %172 = arith.addf %169, %171 : vector<8x1xf32>
    %173 = vector.broadcast %165 : vector<8x1xf32> to vector<8x32xf32>
    %174 = arith.mulf %173, %151 : vector<8x32xf32>
    %175 = arith.truncf %168 : vector<8x8xf32> to vector<8x8xbf16>
    %cst_69 = arith.constant dense<0.000000e+00> : vector<8x32xf32>
    %176 = tpu.matmul %175, %159, %cst_69 {dimension_numbers = #tpu.dot_dimension_numbers<[1], [0], [0], [1], [0, 0, 1, 1], [], []>} : vector<8x8xbf16>, vector<8x32xbf16>, vector<8x32xf32> -> vector<8x32xf32>
    %177 = arith.addf %174, %176 : vector<8x32xf32>
    %c2_i32_70 = arith.constant 2 : i32
    %178 = tpu.reciprocal %172 {approx = true} : vector<8x1xf32> -> vector<8x1xf32>
    %179 = vector.broadcast %178 : vector<8x1xf32> to vector<8x32xf32>
    %180 = arith.mulf %177, %179 : vector<8x32xf32>
    %c0_71 = arith.constant 0 : index
    %c64_72 = arith.constant 64 : index
    %181 = vector.load %arg8[%c0_71, %c64_72] : memref<8x128xf32, #tpu.memory_space<vmem>>, vector<8x32xf32>
    tpu.vector_store %arg8[%c0_71, %c64_72], %180 {strides = array<i32>} : memref<8x128xf32, #tpu.memory_space<vmem>>, vector<8x32xf32>,
    %182 = vector.extract_strided_slice %1 {offsets = [0, 96], sizes = [8, 32], strides = [1, 1]} : vector<8x128xbf16> to vector<8x32xbf16>
    %cst_73 = arith.constant 0xFF800000 : f32
    %183 = vector.broadcast %cst_73 : f32 to vector<8x1xf32>
    %cst_74 = arith.constant 0.000000e+00 : f32
    %184 = vector.broadcast %cst_74 : f32 to vector<8x1xf32>
    %cst_75 = arith.constant 0.000000e+00 : f32
    %185 = vector.broadcast %cst_75 : f32 to vector<8x32xf32>
    %c0_i32_76 = arith.constant 0 : i32
    %c8_i32_77 = arith.constant 8 : i32
    %186 = arith.muli %c0_i32_76, %c8_i32_77 : i32
    %187 = tpu.assume_multiple %186, 8 : i32
    %c0_78 = arith.constant 0 : index
    %188 = arith.index_cast %187 : i32 to index
    %c96 = arith.constant 96 : index
    %189 = vector.load %arg3[%c0_78, %188, %c96] : memref<1x16x128xbf16, #tpu.memory_space<vmem>>, vector<1x8x32xbf16>
    %190 = vector.shape_cast %189 : vector<1x8x32xbf16> to vector<8x32xbf16>
    %c0_79 = arith.constant 0 : index
    %191 = arith.index_cast %187 : i32 to index
    %c96_80 = arith.constant 96 : index
    %192 = vector.load %arg4[%c0_79, %191, %c96_80] : memref<1x16x128xbf16, #tpu.memory_space<vmem>>, vector<1x8x32xbf16>
    %193 = vector.shape_cast %192 : vector<1x8x32xbf16> to vector<8x32xbf16>
    %cst_81 = arith.constant dense<0.000000e+00> : vector<8x8xf32>
    %194 = tpu.matmul %182, %190, %cst_81 {dimension_numbers = #tpu.dot_dimension_numbers<[1], [1], [0], [0], [0, 0, 1, 0], [], []>} : vector<8x32xbf16>, vector<8x32xbf16>, vector<8x8xf32> -> vector<8x8xf32>
    %cst_82 = arith.constant dense<0xFF800000> : vector<8xf32>
    %195 = vector.multi_reduction <maximumf>, %194, %cst_82 [1] : vector<8x8xf32> to vector<8xf32>
    %196 = vector.shape_cast %195 : vector<8xf32> to vector<8x1xf32>
    %197 = arith.maximumf %183, %196 : vector<8x1xf32>
    %198 = arith.subf %183, %197 : vector<8x1xf32>
    %199 = math.exp %198 : vector<8x1xf32>
    %200 = vector.broadcast %197 : vector<8x1xf32> to vector<8x8xf32>
    %201 = arith.subf %194, %200 : vector<8x8xf32>
    %202 = math.exp %201 : vector<8x8xf32>
    %203 = arith.mulf %199, %184 : vector<8x1xf32>
    %cst_83 = arith.constant dense<0.000000e+00> : vector<8xf32>
    %204 = vector.multi_reduction <add>, %202, %cst_83 [1] : vector<8x8xf32> to vector<8xf32>
    %205 = vector.shape_cast %204 : vector<8xf32> to vector<8x1xf32>
    %206 = arith.addf %203, %205 : vector<8x1xf32>
    %207 = vector.broadcast %199 : vector<8x1xf32> to vector<8x32xf32>
    %208 = arith.mulf %207, %185 : vector<8x32xf32>
    %209 = arith.truncf %202 : vector<8x8xf32> to vector<8x8xbf16>
    %cst_84 = arith.constant dense<0.000000e+00> : vector<8x32xf32>
    %210 = tpu.matmul %209, %193, %cst_84 {dimension_numbers = #tpu.dot_dimension_numbers<[1], [0], [0], [1], [0, 0, 1, 1], [], []>} : vector<8x8xbf16>, vector<8x32xbf16>, vector<8x32xf32> -> vector<8x32xf32>
    %211 = arith.addf %208, %210 : vector<8x32xf32>
    %c1_i32_85 = arith.constant 1 : i32
    %c8_i32_86 = arith.constant 8 : i32
    %212 = arith.muli %c1_i32_85, %c8_i32_86 : i32
    %213 = tpu.assume_multiple %212, 8 : i32
    %c0_87 = arith.constant 0 : index
    %214 = arith.index_cast %213 : i32 to index
    %c96_88 = arith.constant 96 : index
    %215 = vector.load %arg3[%c0_87, %214, %c96_88] : memref<1x16x128xbf16, #tpu.memory_space<vmem>>, vector<1x8x32xbf16>
    %216 = vector.shape_cast %215 : vector<1x8x32xbf16> to vector<8x32xbf16>
    %c0_89 = arith.constant 0 : index
    %217 = arith.index_cast %213 : i32 to index
    %c96_90 = arith.constant 96 : index
    %218 = vector.load %arg4[%c0_89, %217, %c96_90] : memref<1x16x128xbf16, #tpu.memory_space<vmem>>, vector<1x8x32xbf16>
    %219 = vector.shape_cast %218 : vector<1x8x32xbf16> to vector<8x32xbf16>
    %cst_91 = arith.constant dense<0.000000e+00> : vector<8x8xf32>
    %220 = tpu.matmul %182, %216, %cst_91 {dimension_numbers = #tpu.dot_dimension_numbers<[1], [1], [0], [0], [0, 0, 1, 0], [], []>} : vector<8x32xbf16>, vector<8x32xbf16>, vector<8x8xf32> -> vector<8x8xf32>
    %cst_92 = arith.constant dense<0xFF800000> : vector<8xf32>
    %221 = vector.multi_reduction <maximumf>, %220, %cst_92 [1] : vector<8x8xf32> to vector<8xf32>
    %222 = vector.shape_cast %221 : vector<8xf32> to vector<8x1xf32>
    %223 = arith.maximumf %197, %222 : vector<8x1xf32>
    %224 = arith.subf %197, %223 : vector<8x1xf32>
    %225 = math.exp %224 : vector<8x1xf32>
    %226 = vector.broadcast %223 : vector<8x1xf32> to vector<8x8xf32>
    %227 = arith.subf %220, %226 : vector<8x8xf32>
    %228 = math.exp %227 : vector<8x8xf32>
    %229 = arith.mulf %225, %206 : vector<8x1xf32>
    %cst_93 = arith.constant dense<0.000000e+00> : vector<8xf32>
    %230 = vector.multi_reduction <add>, %228, %cst_93 [1] : vector<8x8xf32> to vector<8xf32>
    %231 = vector.shape_cast %230 : vector<8xf32> to vector<8x1xf32>
    %232 = arith.addf %229, %231 : vector<8x1xf32>
    %233 = vector.broadcast %225 : vector<8x1xf32> to vector<8x32xf32>
    %234 = arith.mulf %233, %211 : vector<8x32xf32>
    %235 = arith.truncf %228 : vector<8x8xf32> to vector<8x8xbf16>
    %cst_94 = arith.constant dense<0.000000e+00> : vector<8x32xf32>
    %236 = tpu.matmul %235, %219, %cst_94 {dimension_numbers = #tpu.dot_dimension_numbers<[1], [0], [0], [1], [0, 0, 1, 1], [], []>} : vector<8x8xbf16>, vector<8x32xbf16>, vector<8x32xf32> -> vector<8x32xf32>
    %237 = arith.addf %234, %236 : vector<8x32xf32>
    %c2_i32_95 = arith.constant 2 : i32
    %238 = tpu.reciprocal %232 {approx = true} : vector<8x1xf32> -> vector<8x1xf32>
    %239 = vector.broadcast %238 : vector<8x1xf32> to vector<8x32xf32>
    %240 = arith.mulf %237, %239 : vector<8x32xf32>
    %c0_96 = arith.constant 0 : index
    %c96_97 = arith.constant 96 : index
    %241 = vector.load %arg8[%c0_96, %c96_97] : memref<8x128xf32, #tpu.memory_space<vmem>>, vector<8x32xf32>
    tpu.vector_store %arg8[%c0_96, %c96_97], %240 {strides = array<i32>} : memref<8x128xf32, #tpu.memory_space<vmem>>, vector<8x32xf32>,
    %c0_98 = arith.constant 0 : index
    %c0_99 = arith.constant 0 : index
    %242 = vector.load %arg8[%c0_98, %c0_99] : memref<8x128xf32, #tpu.memory_space<vmem>>, vector<8x128xf32>
    %243 = arith.truncf %242 : vector<8x128xf32> to vector<8x128xbf16>
    %c0_100 = arith.constant 0 : index
    %c0_101 = arith.constant 0 : index
    %244 = vector.load %arg5[%c0_100, %c0_101] : memref<128x128xbf16, #tpu.memory_space<vmem>>, vector<128x128xbf16>
    %cst_102 = arith.constant dense<0.000000e+00> : vector<8x128xf32>
    %245 = tpu.matmul %243, %244, %cst_102 {dimension_numbers = #tpu.dot_dimension_numbers<[1], [0], [0], [1], [0, 0, 1, 1], [], []>} : vector<8x128xbf16>, vector<128x128xbf16>, vector<8x128xf32> -> vector<8x128xf32>
    %c0_103 = arith.constant 0 : index
    %c0_104 = arith.constant 0 : index
    %246 = vector.load %arg6[%c0_103, %c0_104] : memref<1x128xf32, #tpu.memory_space<vmem>>, vector<1x128xf32>
    %247 = vector.broadcast %246 : vector<1x128xf32> to vector<8x128xf32>
    %248 = arith.addf %245, %247 : vector<8x128xf32>
    %c0_105 = arith.constant 0 : index
    %c0_106 = arith.constant 0 : index
    %c0_107 = arith.constant 0 : index
    %249 = vector.load %arg7[%c0_105, %c0_106, %c0_107] : memref<1x8x128xf32, #tpu.memory_space<vmem>>, vector<1x8x128xf32>
    %250 = vector.shape_cast %249 : vector<1x8x128xf32> to vector<8x128xf32>
    %251 = vector.shape_cast %248 : vector<8x128xf32> to vector<1x8x128xf32>
    tpu.vector_store %arg7[%c0_105, %c0_106, %c0_107], %251 {strides = array<i32>} : memref<1x8x128xf32, #tpu.memory_space<vmem>>, vector<1x8x128xf32>,
    return
  }
  func.func @transform_0(%arg0: i32, %arg1: i32) -> (i32, i32, i32) {
    %c0_i32 = arith.constant 0 : i32
    %c0_i32_0 = arith.constant 0 : i32
    return %arg0, %arg1, %c0_i32 : i32, i32, i32
  }
  func.func @transform_1(%arg0: i32, %arg1: i32) -> (i32, i32, i32) {
    %c0_i32 = arith.constant 0 : i32
    %c0_i32_0 = arith.constant 0 : i32
    %c0_i32_1 = arith.constant 0 : i32
    return %arg0, %c0_i32, %c0_i32_0 : i32, i32, i32
  }
  func.func @transform_2(%arg0: i32, %arg1: i32) -> (i32, i32, i32) {
    %c0_i32 = arith.constant 0 : i32
    %c0_i32_0 = arith.constant 0 : i32
    %c0_i32_1 = arith.constant 0 : i32
    return %arg0, %c0_i32, %c0_i32_0 : i32, i32, i32
  }
  func.func @transform_3(%arg0: i32, %arg1: i32) -> (i32, i32) {
    %c0_i32 = arith.constant 0 : i32
    %c0_i32_0 = arith.constant 0 : i32
    %c0_i32_1 = arith.constant 0 : i32
    return %c0_i32, %c0_i32_0 : i32, i32
  }
  func.func @transform_4(%arg0: i32, %arg1: i32) -> (i32, i32) {
    %c0_i32 = arith.constant 0 : i32
    %c0_i32_0 = arith.constant 0 : i32
    %c0_i32_1 = arith.constant 0 : i32
    return %c0_i32, %c0_i32_0 : i32, i32
  }
  func.func @transform_5(%arg0: i32, %arg1: i32) -> (i32, i32, i32) {
    %c0_i32 = arith.constant 0 : i32
    %c0_i32_0 = arith.constant 0 : i32
    return %arg0, %arg1, %c0_i32 : i32, i32, i32
  }
}

</mosaic_0001>

<llo_original>
// kernel: rotary_self_attention.2
$region0: #{rotary_self_attention.2}
  #allocation0 [shape = 'u32[]', space=smem, size = 0x4, offset = 0x4, fixed_abs, tag = 'smem constant byte address 0x4 - core index']
  #allocation1 [shape = 'u32[72,128]{1,0:T(1,128)}', space=vmem, size = 0x9000, scoped, tag = 'internal scratch']
  %s0 = inlined_call_operand.vmem [shape: f32[2,16,128], index: 0, kind: input, shape index: {}]
  %s1 = inlined_call_operand.vmem [shape: bf16[2,16,128], index: 1, kind: input, shape index: {}]
  %s2 = inlined_call_operand.vmem [shape: bf16[2,16,128], index: 2, kind: input, shape index: {}]
  %s3 = inlined_call_operand.vmem [shape: f32[1,128], index: 3, kind: input, shape index: {}]
  %s4 = inlined_call_operand.vmem [shape: f32[1,128], index: 4, kind: input, shape index: {}]
  %s5 = inlined_call_operand.vmem [shape: bf16[128,640], index: 5, kind: input, shape index: {}]
  %s6 = inlined_call_operand.vmem [shape: bf16[2,16,128], index: 6, kind: output, shape index: {0}]
  %s7 = inlined_call_operand.vmem [shape: bf16[2,16,128], index: 7, kind: output, shape index: {1}]
  %s8 = inlined_call_operand.vmem [shape: bf16[2,16,128], index: 8, kind: output, shape index: {2}]
  %9 = xla_tuple %s6, %s7, %s8
  %s10 = sld [smem:[#allocation0]]
  $region73: #{rotary_self_attention.2} parent=0
    _
  %s12 = ssub.s32 1, %s10
  %s13 = scalar_select 0, %s12, %s10
  loop: start=0, step=1, limit=6
  $region2: #{rotary_self_attention.2} parent=0 // loop_pre_header
    _
  $region3: #{rotary_self_attention.2} parent=0 // loop_header
    %s15 = sphi 0, %s19
    %p16 = scmp.ge.s32.totalorder %s15, 6
    %s22 = sphi 0, %s34
    %s23 = sphi 0, %s30
    %s24 = sphi 0, %s22
    %s25 = sphi 0, %s23
    %s26 = sphi 0, %s24
    %s27 = sphi 0, %s25
    %s39 = sphi 0, %s41
    %s42 = sphi 0, %s39
    %s43 = sphi 0, %s42
    %s59 = sphi 0, %s43
    %s67 = sphi 0, %s69
    %s70 = sphi 0, %s67
    %s71 = sphi 0, %s70
    %s87 = sphi 0, %s71
    %s95 = sphi 0, %s97
    %s98 = sphi 0, %s95
    %s99 = sphi 0, %s98
    %s115 = sphi 0, %s99
    %s119 = sphi 0, %s119
    %s121 = sphi 0, %s119
    %s122 = sphi 0, %s121
    %s136 = sphi 0, %s122
    %s140 = sphi 0, %s140
    %s142 = sphi 0, %s140
    %s143 = sphi 0, %s142
    %s157 = sphi 0, %s143
    %s161 = sphi 0, %s161
    %s163 = sphi 0, %s161
    %s164 = sphi 0, %s163
    %s178 = sphi 0, %s164
    %s186 = sphi 0, %s188
    %s189 = sphi 0, %s186
    %s190 = sphi 0, %s189
    %s206 = sphi 0, %s190
    %s214 = sphi 0, %s216
    %s217 = sphi 0, %s214
    %s218 = sphi 0, %s217
    %s234 = sphi 0, %s218
    %s242 = sphi 0, %s244
    %s245 = sphi 0, %s242
    %s246 = sphi 0, %s245
    %s262 = sphi 0, %s246
  $region4: #{rotary_self_attention.2} parent=0 // loop_header_branch
    %18 = sbr.rel (%p16) target = $region8
  $region5: #{rotary_self_attention.2} parent=0 // loop_body
    %s20 = ssub.s32 %s15, 1
    %s21 = ssub.s32 %s15, 2
    %s28 = sadd.s32 1, %s23
    %p29 = scmp.ge.s32.totalorder %s28, 2
    %s30 = scalar_select %p29, 0, %s28
    %s31 = sadd.s32 1, %s22
    %s32 = scalar_select %p29, %s31, %s22
    %p33 = scmp.ge.s32.totalorder %s32, 2
    %s34 = scalar_select %p33, 0, %s32
    %s35 = ssub.s32 %s22, %s34
    %s36 = ssub.s32 %s23, %s30
    %s37 = sor.u32 %s35, %s36
    %p38 = scmp.eq.s32.totalorder %s37, 0
    %s40 = sadd.s32 %s39, 1
    %s41 = scalar_select %p38, %s39, %s40
    %p44 = pneg %p38
    %p45 = scmp.eq.s32.totalorder %s15, 3
    %p46 = por %p44, %p45
    %p47 = scmp.ne.s32.totalorder %s39, %s42
    %p48 = scmp.eq.s32.totalorder %s15, 0
    %p49 = por %p47, %p48
    %p50 = scmp.ne.s32.totalorder %s39, %s42
    %p51 = scmp.eq.s32.totalorder %s20, 3
    %p52 = por %p50, %p51
    %p53 = scmp.ne.s32.totalorder %s42, %s43
    %p54 = scmp.eq.s32.totalorder %s20, 0
    %p55 = por %p53, %p54
    %p56 = scmp.ne.s32.totalorder %s42, %s43
    %p57 = scmp.eq.s32.totalorder %s21, 3
    %p58 = por %p56, %p57
    %p60 = scmp.ne.s32.totalorder %s43, %s59
    %p61 = scmp.eq.s32.totalorder %s21, 0
    %p62 = por %p60, %p61
    %s63 = ssub.s32 %s22, %s34
    %s64 = ssub.s32 %s23, %s30
    %s65 = sor.u32 %s63, %s64
    %p66 = scmp.eq.s32.totalorder %s65, 0
    %s68 = sadd.s32 %s67, 1
    %s69 = scalar_select %p66, %s67, %s68
    %p72 = pneg %p66
    %p73 = scmp.eq.s32.totalorder %s15, 3
    %p74 = por %p72, %p73
    %p75 = scmp.ne.s32.totalorder %s67, %s70
    %p76 = scmp.eq.s32.totalorder %s15, 0
    %p77 = por %p75, %p76
    %p78 = scmp.ne.s32.totalorder %s67, %s70
    %p79 = scmp.eq.s32.totalorder %s20, 3
    %p80 = por %p78, %p79
    %p81 = scmp.ne.s32.totalorder %s70, %s71
    %p82 = scmp.eq.s32.totalorder %s20, 0
    %p83 = por %p81, %p82
    %p84 = scmp.ne.s32.totalorder %s70, %s71
    %p85 = scmp.eq.s32.totalorder %s21, 3
    %p86 = por %p84, %p85
    %p88 = scmp.ne.s32.totalorder %s71, %s87
    %p89 = scmp.eq.s32.totalorder %s21, 0
    %p90 = por %p88, %p89
    %s91 = ssub.s32 %s22, %s34
    %s92 = ssub.s32 %s23, %s30
    %s93 = sor.u32 %s91, %s92
    %p94 = scmp.eq.s32.totalorder %s93, 0
    %s96 = sadd.s32 %s95, 1
    %s97 = scalar_select %p94, %s95, %s96
    %p100 = pneg %p94
    %p101 = scmp.eq.s32.totalorder %s15, 3
    %p102 = por %p100, %p101
    %p103 = scmp.ne.s32.totalorder %s95, %s98
    %p104 = scmp.eq.s32.totalorder %s15, 0
    %p105 = por %p103, %p104
    %p106 = scmp.ne.s32.totalorder %s95, %s98
    %p107 = scmp.eq.s32.totalorder %s20, 3
    %p108 = por %p106, %p107
    %p109 = scmp.ne.s32.totalorder %s98, %s99
    %p110 = scmp.eq.s32.totalorder %s20, 0
    %p111 = por %p109, %p110
    %p112 = scmp.ne.s32.totalorder %s98, %s99
    %p113 = scmp.eq.s32.totalorder %s21, 3
    %p114 = por %p112, %p113
    %p116 = scmp.ne.s32.totalorder %s99, %s115
    %p117 = scmp.eq.s32.totalorder %s21, 0
    %p118 = por %p116, %p117
    %s120 = sadd.s32 %s119, 1
    %p123 = scmp.eq.s32.totalorder %s15, 3
    %p124 = scmp.ne.s32.totalorder %s119, %s121
    %p125 = scmp.eq.s32.totalorder %s15, 0
    %p126 = por %p124, %p125
    %p127 = scmp.ne.s32.totalorder %s119, %s121
    %p128 = scmp.eq.s32.totalorder %s20, 3
    %p129 = por %p127, %p128
    %p130 = scmp.ne.s32.totalorder %s121, %s122
    %p131 = scmp.eq.s32.totalorder %s20, 0
    %p132 = por %p130, %p131
    %p133 = scmp.ne.s32.totalorder %s121, %s122
    %p134 = scmp.eq.s32.totalorder %s21, 3
    %p135 = por %p133, %p134
    %p137 = scmp.ne.s32.totalorder %s122, %s136
    %p138 = scmp.eq.s32.totalorder %s21, 0
    %p139 = por %p137, %p138
    %s141 = sadd.s32 %s140, 1
    %p144 = scmp.eq.s32.totalorder %s15, 3
    %p145 = scmp.ne.s32.totalorder %s140, %s142
    %p146 = scmp.eq.s32.totalorder %s15, 0
    %p147 = por %p145, %p146
    %p148 = scmp.ne.s32.totalorder %s140, %s142
    %p149 = scmp.eq.s32.totalorder %s20, 3
    %p150 = por %p148, %p149
    %p151 = scmp.ne.s32.totalorder %s142, %s143
    %p152 = scmp.eq.s32.totalorder %s20, 0
    %p153 = por %p151, %p152
    %p154 = scmp.ne.s32.totalorder %s142, %s143
    %p155 = scmp.eq.s32.totalorder %s21, 3
    %p156 = por %p154, %p155
    %p158 = scmp.ne.s32.totalorder %s143, %s157
    %p159 = scmp.eq.s32.totalorder %s21, 0
    %p160 = por %p158, %p159
    %s162 = sadd.s32 %s161, 1
    %p165 = scmp.eq.s32.totalorder %s15, 3
    %p166 = scmp.ne.s32.totalorder %s161, %s163
    %p167 = scmp.eq.s32.totalorder %s15, 0
    %p168 = por %p166, %p167
    %p169 = scmp.ne.s32.totalorder %s161, %s163
    %p170 = scmp.eq.s32.totalorder %s20, 3
    %p171 = por %p169, %p170
    %p172 = scmp.ne.s32.totalorder %s163, %s164
    %p173 = scmp.eq.s32.totalorder %s20, 0
    %p174 = por %p172, %p173
    %p175 = scmp.ne.s32.totalorder %s163, %s164
    %p176 = scmp.eq.s32.totalorder %s21, 3
    %p177 = por %p175, %p176
    %p179 = scmp.ne.s32.totalorder %s164, %s178
    %p180 = scmp.eq.s32.totalorder %s21, 0
    %p181 = por %p179, %p180
    %s182 = ssub.s32 %s22, %s34
    %s183 = ssub.s32 %s23, %s30
    %s184 = sor.u32 %s182, %s183
    %p185 = scmp.eq.s32.totalorder %s184, 0
    %s187 = sadd.s32 %s186, 1
    %s188 = scalar_select %p185, %s186, %s187
    %p191 = pneg %p185
    %p192 = scmp.eq.s32.totalorder %s15, 3
    %p193 = por %p191, %p192
    %p194 = scmp.ne.s32.totalorder %s186, %s189
    %p195 = scmp.eq.s32.totalorder %s15, 0
    %p196 = por %p194, %p195
    %p197 = scmp.ne.s32.totalorder %s186, %s189
    %p198 = scmp.eq.s32.totalorder %s20, 3
    %p199 = por %p197, %p198
    %p200 = scmp.ne.s32.totalorder %s189, %s190
    %p201 = scmp.eq.s32.totalorder %s20, 0
    %p202 = por %p200, %p201
    %p203 = scmp.ne.s32.totalorder %s189, %s190
    %p204 = scmp.eq.s32.totalorder %s21, 3
    %p205 = por %p203, %p204
    %p207 = scmp.ne.s32.totalorder %s190, %s206
    %p208 = scmp.eq.s32.totalorder %s21, 0
    %p209 = por %p207, %p208
    %s210 = ssub.s32 %s22, %s34
    %s211 = ssub.s32 %s23, %s30
    %s212 = sor.u32 %s210, %s211
    %p213 = scmp.eq.s32.totalorder %s212, 0
    %s215 = sadd.s32 %s214, 1
    %s216 = scalar_select %p213, %s214, %s215
    %p219 = pneg %p213
    %p220 = scmp.eq.s32.totalorder %s15, 3
    %p221 = por %p219, %p220
    %p222 = scmp.ne.s32.totalorder %s214, %s217
    %p223 = scmp.eq.s32.totalorder %s15, 0
    %p224 = por %p222, %p223
    %p225 = scmp.ne.s32.totalorder %s214, %s217
    %p226 = scmp.eq.s32.totalorder %s20, 3
    %p227 = por %p225, %p226
    %p228 = scmp.ne.s32.totalorder %s217, %s218
    %p229 = scmp.eq.s32.totalorder %s20, 0
    %p230 = por %p228, %p229
    %p231 = scmp.ne.s32.totalorder %s217, %s218
    %p232 = scmp.eq.s32.totalorder %s21, 3
    %p233 = por %p231, %p232
    %p235 = scmp.ne.s32.totalorder %s218, %s234
    %p236 = scmp.eq.s32.totalorder %s21, 0
    %p237 = por %p235, %p236
    %s238 = ssub.s32 %s22, %s34
    %s239 = ssub.s32 %s23, %s30
    %s240 = sor.u32 %s238, %s239
    %p241 = scmp.eq.s32.totalorder %s240, 0
    %s243 = sadd.s32 %s242, 1
    %s244 = scalar_select %p241, %s242, %s243
    %p247 = pneg %p241
    %p248 = scmp.eq.s32.totalorder %s15, 3
    %p249 = por %p247, %p248
    %p250 = scmp.ne.s32.totalorder %s242, %s245
    %p251 = scmp.eq.s32.totalorder %s15, 0
    %p252 = por %p250, %p251
    %p253 = scmp.ne.s32.totalorder %s242, %s245
    %p254 = scmp.eq.s32.totalorder %s20, 3
    %p255 = por %p253, %p254
    %p256 = scmp.ne.s32.totalorder %s245, %s246
    %p257 = scmp.eq.s32.totalorder %s20, 0
    %p258 = por %p256, %p257
    %p259 = scmp.ne.s32.totalorder %s245, %s246
    %p260 = scmp.eq.s32.totalorder %s21, 3
    %p261 = por %p259, %p260
    %p263 = scmp.ne.s32.totalorder %s246, %s262
    %p264 = scmp.eq.s32.totalorder %s21, 0
    %p265 = por %p263, %p264
    %p266 = scmp.le.s32.totalorder 1, %s15
    %p267 = scmp.lt.s32.totalorder %s15, 5
    %p268 = pnand %p266, %p267
    %p269 = pneg %p268
    // Predicated region
    $region9: #{rotary_self_attention.2} parent=5 // pred_check
      _
    $region10: #{rotary_self_attention.2} parent=5 // pred_check_branch
      %271 = sbr.rel (%p268) target = $region12
    $region11: #{rotary_self_attention.2} parent=5 // pred_region
      %s272 = ssub.s32 %s15, 1
      // Predicated region
      $region13: #{rotary_self_attention.2} parent=11 // pred_check
        %p273 = pneg %p132
      $region14: #{rotary_self_attention.2} parent=11 // pred_check_branch
        %275 = sbr.rel (%p273) target = $region16
      $region15: #{rotary_self_attention.2} parent=11 // pred_region
        _
      $region16: #{rotary_self_attention.2} parent=11 // pred_fallthru
        _
      // Predicated region
      $region17: #{rotary_self_attention.2} parent=11 // pred_check
        %p276 = pneg %p153
      $region18: #{rotary_self_attention.2} parent=11 // pred_check_branch
        %278 = sbr.rel (%p276) target = $region20
      $region19: #{rotary_self_attention.2} parent=11 // pred_region
        _
      $region20: #{rotary_self_attention.2} parent=11 // pred_fallthru
        _
      // Predicated region
      $region21: #{rotary_self_attention.2} parent=11 // pred_check
        %p279 = pneg %p174
      $region22: #{rotary_self_attention.2} parent=11 // pred_check_branch
        %281 = sbr.rel (%p279) target = $region24
      $region23: #{rotary_self_attention.2} parent=11 // pred_region
        _
      $region24: #{rotary_self_attention.2} parent=11 // pred_fallthru
        _
    $region12: #{rotary_self_attention.2} parent=5 // pred_fallthru
      _
    %p282 = scmp.lt.s32.totalorder %s15, 4
    // Predicated region
    $region25: #{rotary_self_attention.2} parent=5 // pred_check
      %p283 = pneg %p282
    $region26: #{rotary_self_attention.2} parent=5 // pred_check_branch
      %285 = sbr.rel (%p283) target = $region28
    $region27: #{rotary_self_attention.2} parent=5 // pred_region
      // Predicated region
      $region29: #{rotary_self_attention.2} parent=27 // pred_check
        %p286 = pneg %p49
      $region30: #{rotary_self_attention.2} parent=27 // pred_check_branch
        %288 = sbr.rel (%p286) target = $region32
      $region31: #{rotary_self_attention.2} parent=27 // pred_region
        %p289 = scmp.lt.s32.totalorder %s22, 1
        %s290 = scalar_select %p289, %s22, 1
        %p291 = scmp.lt.s32.totalorder %s23, 1
        %s292 = scalar_select %p291, %s23, 1
        %s293 = smul.addr %s290, 2
        %s294 = sadd.s32 %s292, %s293
        %s295 = smul.addr %s294, 8
        %s296 = scalar_lea.vmem %s0, %s295
      $region32: #{rotary_self_attention.2} parent=27 // pred_fallthru
        _
      // Predicated region
      $region33: #{rotary_self_attention.2} parent=27 // pred_check
        %p297 = pneg %p77
      $region34: #{rotary_self_attention.2} parent=27 // pred_check_branch
        %299 = sbr.rel (%p297) target = $region36
      $region35: #{rotary_self_attention.2} parent=27 // pred_region
        %p300 = scmp.lt.s32.totalorder %s22, 1
        %s301 = scalar_select %p300, %s22, 1
        %p302 = scmp.lt.s32.totalorder %s23, 1
        %s303 = scalar_select %p302, %s23, 1
        %s304 = smul.addr %s301, 2
        %s305 = sadd.s32 %s303, %s304
        %s306 = smul.addr %s305, 4
        %s307 = scalar_lea.vmem %s1, %s306
      $region36: #{rotary_self_attention.2} parent=27 // pred_fallthru
        _
      // Predicated region
      $region37: #{rotary_self_attention.2} parent=27 // pred_check
        %p308 = pneg %p105
      $region38: #{rotary_self_attention.2} parent=27 // pred_check_branch
        %310 = sbr.rel (%p308) target = $region40
      $region39: #{rotary_self_attention.2} parent=27 // pred_region
        %p311 = scmp.lt.s32.totalorder %s22, 1
        %s312 = scalar_select %p311, %s22, 1
        %p313 = scmp.lt.s32.totalorder %s23, 1
        %s314 = scalar_select %p313, %s23, 1
        %s315 = smul.addr %s312, 2
        %s316 = sadd.s32 %s314, %s315
        %s317 = smul.addr %s316, 4
        %s318 = scalar_lea.vmem %s2, %s317
      $region40: #{rotary_self_attention.2} parent=27 // pred_fallthru
        _
    $region28: #{rotary_self_attention.2} parent=5 // pred_fallthru
      _
    %p319 = scmp.le.s32.totalorder 1, %s15
    %p320 = scmp.lt.s32.totalorder %s15, 5
    %p321 = pnand %p319, %p320
    %p322 = pneg %p321
    // Predicated region
    $region41: #{rotary_self_attention.2} parent=5 // pred_check
      _
    $region42: #{rotary_self_attention.2} parent=5 // pred_check_branch
      %324 = sbr.rel (%p321) target = $region44
    $region43: #{rotary_self_attention.2} parent=5 // pred_region
      %s325 = ssub.s32 %s15, 1
      %p326 = scmp.lt.s32.totalorder %s24, 1
      %s327 = scalar_select %p326, %s24, 1
      %p328 = scmp.lt.s32.totalorder %s25, 1
      %s329 = scalar_select %p328, %s25, 1
      %s330 = smul.addr %s327, 2
      %s331 = sadd.s32 %s329, %s330
      %s332 = smul.addr %s331, 8
      %s333 = scalar_lea.vmem %s0, %s332
      %p334 = pneg %p55
      %p335 = pneg %p52
      %p336 = scmp.lt.s32.totalorder %s24, 1
      %s337 = scalar_select %p336, %s24, 1
      %p338 = scmp.lt.s32.totalorder %s25, 1
      %s339 = scalar_select %p338, %s25, 1
      %s340 = smul.addr %s337, 2
      %s341 = sadd.s32 %s339, %s340
      %s342 = smul.addr %s341, 4
      %s343 = scalar_lea.vmem %s1, %s342
      %p344 = pneg %p83
      %p345 = pneg %p80
      %p346 = scmp.lt.s32.totalorder %s24, 1
      %s347 = scalar_select %p346, %s24, 1
      %p348 = scmp.lt.s32.totalorder %s25, 1
      %s349 = scalar_select %p348, %s25, 1
      %s350 = smul.addr %s347, 2
      %s351 = sadd.s32 %s349, %s350
      %s352 = smul.addr %s351, 4
      %s353 = scalar_lea.vmem %s2, %s352
      %p354 = pneg %p111
      %p355 = pneg %p108
      %p356 = pneg %p132
      %p357 = pneg %p129
      %p358 = pneg %p153
      %p359 = pneg %p150
      %p360 = pneg %p174
      %p361 = pneg %p171
      %p362 = pneg %p202
      %p363 = pneg %p199
      %p364 = scmp.lt.s32.totalorder %s24, 1
      %s365 = scalar_select %p364, %s24, 1
      %p366 = scmp.lt.s32.totalorder %s25, 1
      %s367 = scalar_select %p366, %s25, 1
      %s368 = smul.addr %s365, 2
      %s369 = sadd.s32 %s367, %s368
      %s370 = smul.addr %s369, 4
      %s371 = scalar_lea.vmem %s6, %s370
      %p372 = pneg %p230
      %p373 = pneg %p227
      %p374 = scmp.lt.s32.totalorder %s24, 1
      %s375 = scalar_select %p374, %s24, 1
      %p376 = scmp.lt.s32.totalorder %s25, 1
      %s377 = scalar_select %p376, %s25, 1
      %s378 = smul.addr %s375, 2
      %s379 = sadd.s32 %s377, %s378
      %s380 = smul.addr %s379, 4
      %s381 = scalar_lea.vmem %s7, %s380
      %p382 = pneg %p258
      %p383 = pneg %p255
      %p384 = scmp.lt.s32.totalorder %s24, 1
      %s385 = scalar_select %p384, %s24, 1
      %p386 = scmp.lt.s32.totalorder %s25, 1
      %s387 = scalar_select %p386, %s25, 1
      %s388 = smul.addr %s385, 2
      %s389 = sadd.s32 %s387, %s388
      %s390 = smul.addr %s389, 4
      %s391 = scalar_lea.vmem %s8, %s390
      %p392 = scmp.lt.s32.totalorder %s24, 1
      %s393 = scalar_select %p392, %s24, 1
      %p394 = scmp.lt.s32.totalorder %s25, 1
      %s395 = scalar_select %p394, %s25, 1
      %s396 = smul.addr %s393, 2
      %s397 = sadd.s32 %s395, %s396
      %s398 = smul.addr %s397, 8
      %s399 = scalar_lea.vmem %s0, %s398
      %p400 = scmp.lt.s32.totalorder %s24, 1
      %s401 = scalar_select %p400, %s24, 1
      %p402 = scmp.lt.s32.totalorder %s25, 1
      %s403 = scalar_select %p402, %s25, 1
      %s404 = smul.addr %s401, 2
      %s405 = sadd.s32 %s403, %s404
      %s406 = smul.addr %s405, 4
      %s407 = scalar_lea.vmem %s1, %s406
      %p408 = scmp.lt.s32.totalorder %s24, 1
      %s409 = scalar_select %p408, %s24, 1
      %p410 = scmp.lt.s32.totalorder %s25, 1
      %s411 = scalar_select %p410, %s25, 1
      %s412 = smul.addr %s409, 2
      %s413 = sadd.s32 %s411, %s412
      %s414 = smul.addr %s413, 4
      %s415 = scalar_lea.vmem %s2, %s414
      %p416 = scmp.lt.s32.totalorder %s24, 1
      %s417 = scalar_select %p416, %s24, 1
      %p418 = scmp.lt.s32.totalorder %s25, 1
      %s419 = scalar_select %p418, %s25, 1
      %s420 = smul.addr %s417, 2
      %s421 = sadd.s32 %s419, %s420
      %s422 = smul.addr %s421, 4
      %s423 = scalar_lea.vmem %s6, %s422
      %p424 = scmp.lt.s32.totalorder %s24, 1
      %s425 = scalar_select %p424, %s24, 1
      %p426 = scmp.lt.s32.totalorder %s25, 1
      %s427 = scalar_select %p426, %s25, 1
      %s428 = smul.addr %s425, 2
      %s429 = sadd.s32 %s427, %s428
      %s430 = smul.addr %s429, 4
      %s431 = scalar_lea.vmem %s7, %s430
      %p432 = scmp.lt.s32.totalorder %s24, 1
      %s433 = scalar_select %p432, %s24, 1
      %p434 = scmp.lt.s32.totalorder %s25, 1
      %s435 = scalar_select %p434, %s25, 1
      %s436 = smul.addr %s433, 2
      %s437 = sadd.s32 %s435, %s436
      %s438 = smul.addr %s437, 4
      %s439 = scalar_lea.vmem %s8, %s438
      %v440 = vld [vmem:[%s399] sm:$0xff]
      %441 = vadd.xlane.f32.xlu0 %v440
      %v442 = vpop.xlane.xlu0 %441
      %v443 = vrcp.pop 128.0
      %v444 = vmul.f32 128.0, %v443
      %v445 = vsub.f32 1.0, %v444
      %v446 = vmul.f32 %v443, %v445
      %v447 = vadd.f32 %v443, %v446
      %vm448 = vweird.f32 %v443
      %v449 = vsel %vm448, %v443, %v447
      %v450 = vmul.f32 %v442, %v449
      %v451 = vsub.f32 %v440, %v450
      %v452 = vmul.f32 %v451, %v451
      %453 = vadd.xlane.f32.xlu0 %v452
      %v454 = vpop.xlane.xlu0 %453
      %v455 = vmul.f32 %v454, %v449
      %v456 = vadd.f32 %v455, 1e-05
      %v457 = vrsqrt.pop %v456
      %v458 = vmul.f32 %v457, %v456
      %v459 = vmul.f32 %v458, %v457
      %v460 = vmul.f32 0.5, %v459
      %v461 = vsub.f32 1.5, %v460
      %v462 = vmul.f32 %v457, %v461
      %vm463 = vweird.f32 %v456
      %vm464 = vweird.f32 %v457
      %vm465 = vmor %vm463, %vm464
      %v466 = vsel %vm465, %v457, %v462
      %v467 = vmul.f32 %v451, %v466
      %v468 = vld [vmem:[%s3] sm:$0x1]
      %v470 = vperm.slane %v468, 0
      %v472 = vmul.f32 %v467, %v470
      %v473 = vld [vmem:[%s4] sm:$0x1]
      %v475 = vperm.slane %v473, 0
      %v477 = vadd.f32 %v472, %v475
      %v478 = vpack.c.bf16 %v477, %v477
      %v479 = vld [vmem:[%s5] sm:$0xff]
      %v480 = vld [vmem:[%s5 + $0x8] sm:$0xff]
      %v481 = vld [vmem:[%s5 + $0x10] sm:$0xf]
      %v482 = vld [vmem:[%s5 + $0x14] sm:$0xff]
      %v483 = vld [vmem:[%s5 + $0x1c] sm:$0xff]
      %v484 = vld [vmem:[%s5 + $0x24] sm:$0xf]
      %v485 = vld [vmem:[%s5 + $0x28] sm:$0xff]
      %v486 = vld [vmem:[%s5 + $0x30] sm:$0xff]
      %v487 = vld [vmem:[%s5 + $0x38] sm:$0xf]
      %v488 = vld [vmem:[%s5 + $0x3c] sm:$0xff]
      %v489 = vld [vmem:[%s5 + $0x44] sm:$0xff]
      %v490 = vld [vmem:[%s5 + $0x4c] sm:$0xf]
      %v491 = vld [vmem:[%s5 + $0x50] sm:$0xff]
      %v492 = vld [vmem:[%s5 + $0x58] sm:$0xff]
      %v493 = vld [vmem:[%s5 + $0x60] sm:$0xf]
      %v494 = vld [vmem:[%s5 + $0x64] sm:$0xff]
      %v495 = vld [vmem:[%s5 + $0x6c] sm:$0xff]
      %v496 = vld [vmem:[%s5 + $0x74] sm:$0xf]
      %v497 = vld [vmem:[%s5 + $0x78] sm:$0xff]
      %v498 = vld [vmem:[%s5 + $0x80] sm:$0xff]
      %v499 = vld [vmem:[%s5 + $0x88] sm:$0xf]
      %v500 = vld [vmem:[%s5 + $0x8c] sm:$0xff]
      %v501 = vld [vmem:[%s5 + $0x94] sm:$0xff]
      %v502 = vld [vmem:[%s5 + $0x9c] sm:$0xf]
      %v503 = vld [vmem:[%s5 + $0xa0] sm:$0xff]
      %v504 = vld [vmem:[%s5 + $0xa8] sm:$0xff]
      %v505 = vld [vmem:[%s5 + $0xb0] sm:$0xf]
      %v506 = vld [vmem:[%s5 + $0xb4] sm:$0xff]
      %v507 = vld [vmem:[%s5 + $0xbc] sm:$0xff]
      %v508 = vld [vmem:[%s5 + $0xc4] sm:$0xf]
      %v509 = vld [vmem:[%s5 + $0xc8] sm:$0xff]
      %v510 = vld [vmem:[%s5 + $0xd0] sm:$0xff]
      %v511 = vld [vmem:[%s5 + $0xd8] sm:$0xf]
      %v512 = vld [vmem:[%s5 + $0xdc] sm:$0xff]
      %v513 = vld [vmem:[%s5 + $0xe4] sm:$0xff]
      %v514 = vld [vmem:[%s5 + $0xec] sm:$0xf]
      %v515 = vld [vmem:[%s5 + $0xf0] sm:$0xff]
      %v516 = vld [vmem:[%s5 + $0xf8] sm:$0xff]
      %v517 = vld [vmem:[%s5 + $0x100] sm:$0xf]
      %v518 = vld [vmem:[%s5 + $0x104] sm:$0xff]
      %v519 = vld [vmem:[%s5 + $0x10c] sm:$0xff]
      %v520 = vld [vmem:[%s5 + $0x114] sm:$0xf]
      %v521 = vld [vmem:[%s5 + $0x118] sm:$0xff]
      %v522 = vld [vmem:[%s5 + $0x120] sm:$0xff]
      %v523 = vld [vmem:[%s5 + $0x128] sm:$0xf]
      %v524 = vld [vmem:[%s5 + $0x12c] sm:$0xff]
      %v525 = vld [vmem:[%s5 + $0x134] sm:$0xff]
      %v526 = vld [vmem:[%s5 + $0x13c] sm:$0xf]
      %v575 = vunpack.c.l.b16 %v479
      %v576 = vunpack.c.h.b16 %v479
      %v577 = vunpack.c.l.b16 %v480
      %v578 = vunpack.c.h.b16 %v480
      %v579 = vunpack.c.l.b16 %v481
      %v580 = vunpack.c.l.b16 %v482
      %v581 = vunpack.c.h.b16 %v482
      %v582 = vunpack.c.l.b16 %v483
      %v583 = vunpack.c.h.b16 %v483
      %v584 = vunpack.c.l.b16 %v484
      %v585 = vunpack.c.l.b16 %v485
      %v586 = vunpack.c.h.b16 %v485
      %v587 = vunpack.c.l.b16 %v486
      %v588 = vunpack.c.h.b16 %v486
      %v589 = vunpack.c.l.b16 %v487
      %v590 = vunpack.c.l.b16 %v488
      %v591 = vunpack.c.h.b16 %v488
      %v592 = vunpack.c.l.b16 %v489
      %v593 = vunpack.c.h.b16 %v489
      %v594 = vunpack.c.l.b16 %v490
      %v595 = vunpack.c.l.b16 %v491
      %v596 = vunpack.c.h.b16 %v491
      %v597 = vunpack.c.l.b16 %v492
      %v598 = vunpack.c.h.b16 %v492
      %v599 = vunpack.c.l.b16 %v493
      %v600 = vunpack.c.l.b16 %v494
      %v601 = vunpack.c.h.b16 %v494
      %v602 = vunpack.c.l.b16 %v495
      %v603 = vunpack.c.h.b16 %v495
      %v604 = vunpack.c.l.b16 %v496
      %v605 = vunpack.c.l.b16 %v497
      %v606 = vunpack.c.h.b16 %v497
      %v607 = vunpack.c.l.b16 %v498
      %v608 = vunpack.c.h.b16 %v498
      %v609 = vunpack.c.l.b16 %v499
      %v610 = vunpack.c.l.b16 %v500
      %v611 = vunpack.c.h.b16 %v500
      %v612 = vunpack.c.l.b16 %v501
      %v613 = vunpack.c.h.b16 %v501
      %v614 = vunpack.c.l.b16 %v502
      %v615 = vunpack.c.l.b16 %v503
      %v616 = vunpack.c.h.b16 %v503
      %v617 = vunpack.c.l.b16 %v504
      %v618 = vunpack.c.h.b16 %v504
      %v619 = vunpack.c.l.b16 %v505
      %v620 = vunpack.c.l.b16 %v506
      %v621 = vunpack.c.h.b16 %v506
      %v622 = vunpack.c.l.b16 %v507
      %v623 = vunpack.c.h.b16 %v507
      %v624 = vunpack.c.l.b16 %v508
      %v625 = vunpack.c.l.b16 %v509
      %v626 = vunpack.c.h.b16 %v509
      %v627 = vunpack.c.l.b16 %v510
      %v628 = vunpack.c.h.b16 %v510
      %v629 = vunpack.c.l.b16 %v511
      %v630 = vunpack.c.l.b16 %v512
      %v631 = vunpack.c.h.b16 %v512
      %v632 = vunpack.c.l.b16 %v513
      %v633 = vunpack.c.h.b16 %v513
      %v634 = vunpack.c.l.b16 %v514
      %v635 = vunpack.c.l.b16 %v515
      %v636 = vunpack.c.h.b16 %v515
      %v637 = vunpack.c.l.b16 %v516
      %v638 = vunpack.c.h.b16 %v516
      %v639 = vunpack.c.l.b16 %v517
      %v640 = vunpack.c.l.b16 %v518
      %v641 = vunpack.c.h.b16 %v518
      %v642 = vunpack.c.l.b16 %v519
      %v643 = vunpack.c.h.b16 %v519
      %v644 = vunpack.c.l.b16 %v520
      %v645 = vunpack.c.l.b16 %v521
      %v646 = vunpack.c.h.b16 %v521
      %v647 = vunpack.c.l.b16 %v522
      %v648 = vunpack.c.h.b16 %v522
      %v649 = vunpack.c.l.b16 %v523
      %v650 = vunpack.c.l.b16 %v524
      %v651 = vunpack.c.h.b16 %v524
      %v652 = vunpack.c.l.b16 %v525
      %v653 = vunpack.c.h.b16 %v525
      %v654 = vunpack.c.l.b16 %v526
      %v655 = vpack.c.b16 %v580, %v575
      %v656 = vpack.c.b16 %v581, %v576
      %v657 = vpack.c.b16 %v582, %v577
      %v658 = vpack.c.b16 %v583, %v578
      %v659 = vpack.c.b16 %v584, %v579
      %v660 = vpack.c.b16 %v590, %v585
      %v661 = vpack.c.b16 %v591, %v586
      %v662 = vpack.c.b16 %v592, %v587
      %v663 = vpack.c.b16 %v593, %v588
      %v664 = vpack.c.b16 %v594, %v589
      %v665 = vpack.c.b16 %v600, %v595
      %v666 = vpack.c.b16 %v601, %v596
      %v667 = vpack.c.b16 %v602, %v597
      %v668 = vpack.c.b16 %v603, %v598
      %v669 = vpack.c.b16 %v604, %v599
      %v670 = vpack.c.b16 %v610, %v605
      %v671 = vpack.c.b16 %v611, %v606
      %v672 = vpack.c.b16 %v612, %v607
      %v673 = vpack.c.b16 %v613, %v608
      %v674 = vpack.c.b16 %v614, %v609
      %v675 = vpack.c.b16 %v620, %v615
      %v676 = vpack.c.b16 %v621, %v616
      %v677 = vpack.c.b16 %v622, %v617
      %v678 = vpack.c.b16 %v623, %v618
      %v679 = vpack.c.b16 %v624, %v619
      %v680 = vpack.c.b16 %v630, %v625
      %v681 = vpack.c.b16 %v631, %v626
      %v682 = vpack.c.b16 %v632, %v627
      %v683 = vpack.c.b16 %v633, %v628
      %v684 = vpack.c.b16 %v634, %v629
      %v685 = vpack.c.b16 %v640, %v635
      %v686 = vpack.c.b16 %v641, %v636
      %v687 = vpack.c.b16 %v642, %v637
      %v688 = vpack.c.b16 %v643, %v638
      %v689 = vpack.c.b16 %v644, %v639
      %v690 = vpack.c.b16 %v650, %v645
      %v691 = vpack.c.b16 %v651, %v646
      %v692 = vpack.c.b16 %v652, %v647
      %v693 = vpack.c.b16 %v653, %v648
      %v694 = vpack.c.b16 %v654, %v649
      %735 = vmatpush.bf16.msra.mxu0 %v690
      %736 = vmatpush.bf16.msra.mxu0 %v685
      %737 = vmatpush.bf16.msra.mxu0 %v680
      %738 = vmatpush.bf16.msra.mxu0 %v675
      %739 = vmatpush.bf16.msra.mxu0 %v670
      %740 = vmatpush.bf16.msra.mxu0 %v665
      %741 = vmatpush.bf16.msra.mxu0 %v660
      %742 = vmatpush.bf16.msra.mxu0 %v655
      %743 = vmatmul.bf16.gmra.mxu0 %v478
      %v744 = vpop.f32.mrf.mxu0
      %v745 = vadd.f32 0.0, %v744
      %v746 = vpop.f32.mrf.mxu0
      %747 = vdwg.mxu0
      %748 = vmatpush.bf16.msra.mxu0 %v691
      %749 = vmatpush.bf16.msra.mxu0 %v686
      %750 = vmatpush.bf16.msra.mxu0 %v681
      %751 = vmatpush.bf16.msra.mxu0 %v676
      %752 = vmatpush.bf16.msra.mxu0 %v671
      %753 = vmatpush.bf16.msra.mxu0 %v666
      %754 = vmatpush.bf16.msra.mxu0 %v661
      %755 = vmatpush.bf16.msra.mxu0 %v656
      %756 = vmatmul.bf16.gmra.mxu0 %v478
      %v757 = vpop.f32.mrf.mxu0
      %v758 = vadd.f32 0.0, %v757
      %v759 = vpop.f32.mrf.mxu0
      %760 = vdwg.mxu0
      %761 = vmatpush.bf16.msra.mxu0 %v692
      %762 = vmatpush.bf16.msra.mxu0 %v687
      %763 = vmatpush.bf16.msra.mxu0 %v682
      %764 = vmatpush.bf16.msra.mxu0 %v677
      %765 = vmatpush.bf16.msra.mxu0 %v672
      %766 = vmatpush.bf16.msra.mxu0 %v667
      %767 = vmatpush.bf16.msra.mxu0 %v662
      %768 = vmatpush.bf16.msra.mxu0 %v657
      %769 = vmatmul.bf16.gmra.mxu0 %v478
      %v770 = vpop.f32.mrf.mxu0
      %v771 = vadd.f32 0.0, %v770
      %v772 = vpop.f32.mrf.mxu0
      %773 = vdwg.mxu0
      %774 = vmatpush.bf16.msra.mxu0 %v693
      %775 = vmatpush.bf16.msra.mxu0 %v688
      %776 = vmatpush.bf16.msra.mxu0 %v683
      %777 = vmatpush.bf16.msra.mxu0 %v678
      %778 = vmatpush.bf16.msra.mxu0 %v673
      %779 = vmatpush.bf16.msra.mxu0 %v668
      %780 = vmatpush.bf16.msra.mxu0 %v663
      %781 = vmatpush.bf16.msra.mxu0 %v658
      %782 = vmatmul.bf16.gmra.mxu0 %v478
      %v783 = vpop.f32.mrf.mxu0
      %v784 = vadd.f32 0.0, %v783
      %v785 = vpop.f32.mrf.mxu0
      %786 = vdwg.mxu0
      %787 = vmatpush.bf16.msra.mxu0 %v694
      %788 = vmatpush.bf16.msra.mxu0 %v689
      %789 = vmatpush.bf16.msra.mxu0 %v684
      %790 = vmatpush.bf16.msra.mxu0 %v679
      %791 = vmatpush.bf16.msra.mxu0 %v674
      %792 = vmatpush.bf16.msra.mxu0 %v669
      %793 = vmatpush.bf16.msra.mxu0 %v664
      %794 = vmatpush.bf16.msra.mxu0 %v659
      %795 = vmatmul.bf16.gmra.mxu0 %v478
      %v796 = vpop.f32.mrf.mxu0
      %v797 = vadd.f32 0.0, %v796
      %v798 = vpop.f32.mrf.mxu0
      %799 = vdwg.mxu0
      %v800 = vld [vmem:[%s407] sm:$0xf]
      %v801 = vunpack.c.l.bf16 %v800
      %v802 = vld [vmem:[%s415] sm:$0xf]
      %v803 = vunpack.c.l.bf16 %v802
      %v804 = vmul.f32 %v745, %v801
      %v805 = vmul.f32 %v784, %v803
      %v806 = vadd.f32 %v804, %v805
      %v807 = vpack.c.bf16 %v806, %v806
      %808 = vst [vmem:[%s423] sm:$0xf] %v807
      %v809 = vmul.f32 %v758, %v801
      %v810 = vmul.f32 %v797, %v803
      %v811 = vadd.f32 %v809, %v810
      %v812 = vpack.c.bf16 %v811, %v811
      %813 = vst [vmem:[%s431] sm:$0xf] %v812
      %v814 = vpack.c.bf16 %v771, %v771
      %815 = vst [vmem:[%s439] sm:$0xf] %v814
      %p816 = scmp.lt.s32.totalorder %s24, 1
      %s817 = scalar_select %p816, %s24, 1
      %p818 = scmp.lt.s32.totalorder %s25, 1
      %s819 = scalar_select %p818, %s25, 1
      %s820 = smul.addr %s817, 2
      %s821 = sadd.s32 %s819, %s820
      %s822 = smul.addr %s821, 4
      %s823 = scalar_lea.vmem %s6, %s822
      %p824 = scmp.lt.s32.totalorder %s24, 1
      %s825 = scalar_select %p824, %s24, 1
      %p826 = scmp.lt.s32.totalorder %s25, 1
      %s827 = scalar_select %p826, %s25, 1
      %s828 = smul.addr %s825, 2
      %s829 = sadd.s32 %s827, %s828
      %s830 = smul.addr %s829, 4
      %s831 = scalar_lea.vmem %s7, %s830
      %p832 = scmp.lt.s32.totalorder %s24, 1
      %s833 = scalar_select %p832, %s24, 1
      %p834 = scmp.lt.s32.totalorder %s25, 1
      %s835 = scalar_select %p834, %s25, 1
      %s836 = smul.addr %s833, 2
      %s837 = sadd.s32 %s835, %s836
      %s838 = smul.addr %s837, 4
      %s839 = scalar_lea.vmem %s8, %s838
      // Predicated region
      $region45: #{rotary_self_attention.2} parent=43 // pred_check
        %p840 = pneg %p199
      $region46: #{rotary_self_attention.2} parent=43 // pred_check_branch
        %842 = sbr.rel (%p840) target = $region48
      $region47: #{rotary_self_attention.2} parent=43 // pred_region
        _
      $region48: #{rotary_self_attention.2} parent=43 // pred_fallthru
        _
      // Predicated region
      $region49: #{rotary_self_attention.2} parent=43 // pred_check
        %p843 = pneg %p227
      $region50: #{rotary_self_attention.2} parent=43 // pred_check_branch
        %845 = sbr.rel (%p843) target = $region52
      $region51: #{rotary_self_attention.2} parent=43 // pred_region
        _
      $region52: #{rotary_self_attention.2} parent=43 // pred_fallthru
        _
      // Predicated region
      $region53: #{rotary_self_attention.2} parent=43 // pred_check
        %p846 = pneg %p255
      $region54: #{rotary_self_attention.2} parent=43 // pred_check_branch
        %848 = sbr.rel (%p846) target = $region56
      $region55: #{rotary_self_attention.2} parent=43 // pred_region
        _
      $region56: #{rotary_self_attention.2} parent=43 // pred_fallthru
        _
    $region44: #{rotary_self_attention.2} parent=5 // pred_fallthru
      _
    %p849 = scmp.le.s32.totalorder 2, %s15
    // Predicated region
    $region57: #{rotary_self_attention.2} parent=5 // pred_check
      %p850 = pneg %p849
    $region58: #{rotary_self_attention.2} parent=5 // pred_check_branch
      %852 = sbr.rel (%p850) target = $region60
    $region59: #{rotary_self_attention.2} parent=5 // pred_region
      %s853 = ssub.s32 %s15, 2
      // Predicated region
      $region61: #{rotary_self_attention.2} parent=59 // pred_check
        %p854 = pneg %p205
      $region62: #{rotary_self_attention.2} parent=59 // pred_check_branch
        %856 = sbr.rel (%p854) target = $region64
      $region63: #{rotary_self_attention.2} parent=59 // pred_region
        %p857 = scmp.lt.s32.totalorder %s26, 1
        %s858 = scalar_select %p857, %s26, 1
        %p859 = scmp.lt.s32.totalorder %s27, 1
        %s860 = scalar_select %p859, %s27, 1
        %s861 = smul.addr %s858, 2
        %s862 = sadd.s32 %s860, %s861
        %s863 = smul.addr %s862, 4
        %s864 = scalar_lea.vmem %s6, %s863
      $region64: #{rotary_self_attention.2} parent=59 // pred_fallthru
        _
      // Predicated region
      $region65: #{rotary_self_attention.2} parent=59 // pred_check
        %p865 = pneg %p233
      $region66: #{rotary_self_attention.2} parent=59 // pred_check_branch
        %867 = sbr.rel (%p865) target = $region68
      $region67: #{rotary_self_attention.2} parent=59 // pred_region
        %p868 = scmp.lt.s32.totalorder %s26, 1
        %s869 = scalar_select %p868, %s26, 1
        %p870 = scmp.lt.s32.totalorder %s27, 1
        %s871 = scalar_select %p870, %s27, 1
        %s872 = smul.addr %s869, 2
        %s873 = sadd.s32 %s871, %s872
        %s874 = smul.addr %s873, 4
        %s875 = scalar_lea.vmem %s7, %s874
      $region68: #{rotary_self_attention.2} parent=59 // pred_fallthru
        _
      // Predicated region
      $region69: #{rotary_self_attention.2} parent=59 // pred_check
        %p876 = pneg %p261
      $region70: #{rotary_self_attention.2} parent=59 // pred_check_branch
        %878 = sbr.rel (%p876) target = $region72
      $region71: #{rotary_self_attention.2} parent=59 // pred_region
        %p879 = scmp.lt.s32.totalorder %s26, 1
        %s880 = scalar_select %p879, %s26, 1
        %p881 = scmp.lt.s32.totalorder %s27, 1
        %s882 = scalar_select %p881, %s27, 1
        %s883 = smul.addr %s880, 2
        %s884 = sadd.s32 %s882, %s883
        %s885 = smul.addr %s884, 4
        %s886 = scalar_lea.vmem %s8, %s885
      $region72: #{rotary_self_attention.2} parent=59 // pred_fallthru
        _
    $region60: #{rotary_self_attention.2} parent=5 // pred_fallthru
      _
  $region6: #{rotary_self_attention.2} parent=0 // loop_footer
    %s19 = sadd.s32 1, %s15
  $region7: #{rotary_self_attention.2} parent=0 // loop_footer_branch
    %14 = sbr.rel target = $region3
  $region8: #{rotary_self_attention.2} parent=0 // loop_exit
    _

// kernel: rotary_self_attention.3
$region0: #{rotary_self_attention.3}
  #allocation0 [shape = 'u32[]', space=smem, size = 0x4, offset = 0x4, fixed_abs, tag = 'smem constant byte address 0x4 - core index']
  #allocation1 [shape = 'u32[72,128]{1,0:T(1,128)}', space=vmem, size = 0x9000, scoped, tag = 'internal scratch']
  #allocation2 [shape = 'f32[8,128]{1,0:T(8,128)}', space=vmem, size = 0x1000, scoped, tag = 'scratch operand']
  %s0 = inlined_call_operand.vmem [shape: bf16[2,16,128], index: 0, kind: input, shape index: {}]
  %s1 = inlined_call_operand.vmem [shape: bf16[2,16,128], index: 1, kind: input, shape index: {}]
  %s2 = inlined_call_operand.vmem [shape: bf16[2,16,128], index: 2, kind: input, shape index: {}]
  %s3 = inlined_call_operand.vmem [shape: bf16[128,128], index: 3, kind: input, shape index: {}]
  %s4 = inlined_call_operand.vmem [shape: f32[1,128], index: 4, kind: input, shape index: {}]
  %s5 = inlined_call_operand.hbm [shape: f32[2,16,128], index: 5, kind: output, shape index: {}]
  %s6 = sld [smem:[#allocation0]]
  $region53: #{rotary_self_attention.3} parent=0
    _
  %s8 = ssub.s32 1, %s6
  %s9 = scalar_select 0, %s8, %s6
  $region1: #{rotary_self_attention.3} parent=0
    #allocation3 [shape = 'u8[8192]{0}', space=vmem, size = 0x2000, scoped, tag = 'output window, operand 0']
    #allocation4 [shape = 's32[2]{0}', space=sflag, size = 0x8, scoped, tag = 'scoped memory for rotary_self_attention.3']
    %10 = vsyncpa [#allocation4], 0
    %s11 = scalar_lea.sflag [#allocation4], 1
    %12 = vsyncpa %s11, 0
    loop: start=0, step=1, limit=6
    $region2: #{rotary_self_attention.3} parent=1 // loop_pre_header
      _
    $region3: #{rotary_self_attention.3} parent=1 // loop_header
      %s14 = sphi 0, %s18
      %p15 = scmp.ge.s32.totalorder %s14, 6
      %s21 = sphi 0, %s33
      %s22 = sphi 0, %s29
      %s23 = sphi 0, %s21
      %s24 = sphi 0, %s22
      %s25 = sphi 0, %s23
      %s26 = sphi 0, %s24
      %s38 = sphi 0, %s40
      %s41 = sphi 0, %s38
      %s42 = sphi 0, %s41
      %s58 = sphi 0, %s42
      %s64 = sphi 0, %s66
      %s67 = sphi 0, %s64
      %s68 = sphi 0, %s67
      %s84 = sphi 0, %s68
      %s90 = sphi 0, %s92
      %s93 = sphi 0, %s90
      %s94 = sphi 0, %s93
      %s110 = sphi 0, %s94
      %s114 = sphi 0, %s114
      %s116 = sphi 0, %s114
      %s117 = sphi 0, %s116
      %s131 = sphi 0, %s117
      %s135 = sphi 0, %s135
      %s137 = sphi 0, %s135
      %s138 = sphi 0, %s137
      %s152 = sphi 0, %s138
      %s160 = sphi 0, %s162
      %s163 = sphi 0, %s160
      %s164 = sphi 0, %s163
      %s180 = sphi 0, %s164
    $region4: #{rotary_self_attention.3} parent=1 // loop_header_branch
      %17 = sbr.rel (%p15) target = $region8
    $region5: #{rotary_self_attention.3} parent=1 // loop_body
      %s19 = ssub.s32 %s14, 1
      %s20 = ssub.s32 %s14, 2
      %s27 = sadd.s32 1, %s22
      %p28 = scmp.ge.s32.totalorder %s27, 2
      %s29 = scalar_select %p28, 0, %s27
      %s30 = sadd.s32 1, %s21
      %s31 = scalar_select %p28, %s30, %s21
      %p32 = scmp.ge.s32.totalorder %s31, 2
      %s33 = scalar_select %p32, 0, %s31
      %s34 = ssub.s32 %s21, %s33
      %s35 = ssub.s32 %s22, %s29
      %s36 = sor.u32 %s34, %s35
      %p37 = scmp.eq.s32.totalorder %s36, 0
      %s39 = sadd.s32 %s38, 1
      %s40 = scalar_select %p37, %s38, %s39
      %p43 = pneg %p37
      %p44 = scmp.eq.s32.totalorder %s14, 3
      %p45 = por %p43, %p44
      %p46 = scmp.ne.s32.totalorder %s38, %s41
      %p47 = scmp.eq.s32.totalorder %s14, 0
      %p48 = por %p46, %p47
      %p49 = scmp.ne.s32.totalorder %s38, %s41
      %p50 = scmp.eq.s32.totalorder %s19, 3
      %p51 = por %p49, %p50
      %p52 = scmp.ne.s32.totalorder %s41, %s42
      %p53 = scmp.eq.s32.totalorder %s19, 0
      %p54 = por %p52, %p53
      %p55 = scmp.ne.s32.totalorder %s41, %s42
      %p56 = scmp.eq.s32.totalorder %s20, 3
      %p57 = por %p55, %p56
      %p59 = scmp.ne.s32.totalorder %s42, %s58
      %p60 = scmp.eq.s32.totalorder %s20, 0
      %p61 = por %p59, %p60
      %s62 = ssub.s32 %s21, %s33
      %p63 = scmp.eq.s32.totalorder %s62, 0
      %s65 = sadd.s32 %s64, 1
      %s66 = scalar_select %p63, %s64, %s65
      %p69 = pneg %p63
      %p70 = scmp.eq.s32.totalorder %s14, 3
      %p71 = por %p69, %p70
      %p72 = scmp.ne.s32.totalorder %s64, %s67
      %p73 = scmp.eq.s32.totalorder %s14, 0
      %p74 = por %p72, %p73
      %p75 = scmp.ne.s32.totalorder %s64, %s67
      %p76 = scmp.eq.s32.totalorder %s19, 3
      %p77 = por %p75, %p76
      %p78 = scmp.ne.s32.totalorder %s67, %s68
      %p79 = scmp.eq.s32.totalorder %s19, 0
      %p80 = por %p78, %p79
      %p81 = scmp.ne.s32.totalorder %s67, %s68
      %p82 = scmp.eq.s32.totalorder %s20, 3
      %p83 = por %p81, %p82
      %p85 = scmp.ne.s32.totalorder %s68, %s84
      %p86 = scmp.eq.s32.totalorder %s20, 0
      %p87 = por %p85, %p86
      %s88 = ssub.s32 %s21, %s33
      %p89 = scmp.eq.s32.totalorder %s88, 0
      %s91 = sadd.s32 %s90, 1
      %s92 = scalar_select %p89, %s90, %s91
      %p95 = pneg %p89
      %p96 = scmp.eq.s32.totalorder %s14, 3
      %p97 = por %p95, %p96
      %p98 = scmp.ne.s32.totalorder %s90, %s93
      %p99 = scmp.eq.s32.totalorder %s14, 0
      %p100 = por %p98, %p99
      %p101 = scmp.ne.s32.totalorder %s90, %s93
      %p102 = scmp.eq.s32.totalorder %s19, 3
      %p103 = por %p101, %p102
      %p104 = scmp.ne.s32.totalorder %s93, %s94
      %p105 = scmp.eq.s32.totalorder %s19, 0
      %p106 = por %p104, %p105
      %p107 = scmp.ne.s32.totalorder %s93, %s94
      %p108 = scmp.eq.s32.totalorder %s20, 3
      %p109 = por %p107, %p108
      %p111 = scmp.ne.s32.totalorder %s94, %s110
      %p112 = scmp.eq.s32.totalorder %s20, 0
      %p113 = por %p111, %p112
      %s115 = sadd.s32 %s114, 1
      %p118 = scmp.eq.s32.totalorder %s14, 3
      %p119 = scmp.ne.s32.totalorder %s114, %s116
      %p120 = scmp.eq.s32.totalorder %s14, 0
      %p121 = por %p119, %p120
      %p122 = scmp.ne.s32.totalorder %s114, %s116
      %p123 = scmp.eq.s32.totalorder %s19, 3
      %p124 = por %p122, %p123
      %p125 = scmp.ne.s32.totalorder %s116, %s117
      %p126 = scmp.eq.s32.totalorder %s19, 0
      %p127 = por %p125, %p126
      %p128 = scmp.ne.s32.totalorder %s116, %s117
      %p129 = scmp.eq.s32.totalorder %s20, 3
      %p130 = por %p128, %p129
      %p132 = scmp.ne.s32.totalorder %s117, %s131
      %p133 = scmp.eq.s32.totalorder %s20, 0
      %p134 = por %p132, %p133
      %s136 = sadd.s32 %s135, 1
      %p139 = scmp.eq.s32.totalorder %s14, 3
      %p140 = scmp.ne.s32.totalorder %s135, %s137
      %p141 = scmp.eq.s32.totalorder %s14, 0
      %p142 = por %p140, %p141
      %p143 = scmp.ne.s32.totalorder %s135, %s137
      %p144 = scmp.eq.s32.totalorder %s19, 3
      %p145 = por %p143, %p144
      %p146 = scmp.ne.s32.totalorder %s137, %s138
      %p147 = scmp.eq.s32.totalorder %s19, 0
      %p148 = por %p146, %p147
      %p149 = scmp.ne.s32.totalorder %s137, %s138
      %p150 = scmp.eq.s32.totalorder %s20, 3
      %p151 = por %p149, %p150
      %p153 = scmp.ne.s32.totalorder %s138, %s152
      %p154 = scmp.eq.s32.totalorder %s20, 0
      %p155 = por %p153, %p154
      %s156 = ssub.s32 %s21, %s33
      %s157 = ssub.s32 %s22, %s29
      %s158 = sor.u32 %s156, %s157
      %p159 = scmp.eq.s32.totalorder %s158, 0
      %s161 = sadd.s32 %s160, 1
      %s162 = scalar_select %p159, %s160, %s161
      %p165 = pneg %p159
      %p166 = scmp.eq.s32.totalorder %s14, 3
      %p167 = por %p165, %p166
      %p168 = scmp.ne.s32.totalorder %s160, %s163
      %p169 = scmp.eq.s32.totalorder %s14, 0
      %p170 = por %p168, %p169
      %p171 = scmp.ne.s32.totalorder %s160, %s163
      %p172 = scmp.eq.s32.totalorder %s19, 3
      %p173 = por %p171, %p172
      %p174 = scmp.ne.s32.totalorder %s163, %s164
      %p175 = scmp.eq.s32.totalorder %s19, 0
      %p176 = por %p174, %p175
      %p177 = scmp.ne.s32.totalorder %s163, %s164
      %p178 = scmp.eq.s32.totalorder %s20, 3
      %p179 = por %p177, %p178
      %p181 = scmp.ne.s32.totalorder %s164, %s180
      %p182 = scmp.eq.s32.totalorder %s20, 0
      %p183 = por %p181, %p182
      %p184 = scmp.le.s32.totalorder 1, %s14
      %p185 = scmp.lt.s32.totalorder %s14, 5
      %p186 = pnand %p184, %p185
      %p187 = pneg %p186
      // Predicated region
      $region9: #{rotary_self_attention.3} parent=5 // pred_check
        _
      $region10: #{rotary_self_attention.3} parent=5 // pred_check_branch
        %189 = sbr.rel (%p186) target = $region12
      $region11: #{rotary_self_attention.3} parent=5 // pred_region
        %s190 = ssub.s32 %s14, 1
        // Predicated region
        $region13: #{rotary_self_attention.3} parent=11 // pred_check
          %p191 = pneg %p80
        $region14: #{rotary_self_attention.3} parent=11 // pred_check_branch
          %193 = sbr.rel (%p191) target = $region16
        $region15: #{rotary_self_attention.3} parent=11 // pred_region
          %p194 = scmp.lt.s32.totalorder %s23, 1
          %s195 = scalar_select %p194, %s23, 1
          %s196 = smul.addr %s195, 2
          %s197 = smul.addr %s196, 4
          %s198 = scalar_lea.vmem %s1, %s197
        $region16: #{rotary_self_attention.3} parent=11 // pred_fallthru
          _
        // Predicated region
        $region17: #{rotary_self_attention.3} parent=11 // pred_check
          %p199 = pneg %p106
        $region18: #{rotary_self_attention.3} parent=11 // pred_check_branch
          %201 = sbr.rel (%p199) target = $region20
        $region19: #{rotary_self_attention.3} parent=11 // pred_region
          %p202 = scmp.lt.s32.totalorder %s23, 1
          %s203 = scalar_select %p202, %s23, 1
          %s204 = smul.addr %s203, 2
          %s205 = smul.addr %s204, 4
          %s206 = scalar_lea.vmem %s2, %s205
        $region20: #{rotary_self_attention.3} parent=11 // pred_fallthru
          _
        // Predicated region
        $region21: #{rotary_self_attention.3} parent=11 // pred_check
          %p207 = pneg %p127
        $region22: #{rotary_self_attention.3} parent=11 // pred_check_branch
          %209 = sbr.rel (%p207) target = $region24
        $region23: #{rotary_self_attention.3} parent=11 // pred_region
          _
        $region24: #{rotary_self_attention.3} parent=11 // pred_fallthru
          _
        // Predicated region
        $region25: #{rotary_self_attention.3} parent=11 // pred_check
          %p210 = pneg %p148
        $region26: #{rotary_self_attention.3} parent=11 // pred_check_branch
          %212 = sbr.rel (%p210) target = $region28
        $region27: #{rotary_self_attention.3} parent=11 // pred_region
          _
        $region28: #{rotary_self_attention.3} parent=11 // pred_fallthru
          _
      $region12: #{rotary_self_attention.3} parent=5 // pred_fallthru
        _
      %p213 = scmp.lt.s32.totalorder %s14, 4
      // Predicated region
      $region29: #{rotary_self_attention.3} parent=5 // pred_check
        %p214 = pneg %p213
      $region30: #{rotary_self_attention.3} parent=5 // pred_check_branch
        %216 = sbr.rel (%p214) target = $region32
      $region31: #{rotary_self_attention.3} parent=5 // pred_region
        // Predicated region
        $region33: #{rotary_self_attention.3} parent=31 // pred_check
          %p217 = pneg %p48
        $region34: #{rotary_self_attention.3} parent=31 // pred_check_branch
          %219 = sbr.rel (%p217) target = $region36
        $region35: #{rotary_self_attention.3} parent=31 // pred_region
          %p220 = scmp.lt.s32.totalorder %s21, 1
          %s221 = scalar_select %p220, %s21, 1
          %p222 = scmp.lt.s32.totalorder %s22, 1
          %s223 = scalar_select %p222, %s22, 1
          %s224 = smul.addr %s221, 2
          %s225 = sadd.s32 %s223, %s224
          %s226 = smul.addr %s225, 4
          %s227 = scalar_lea.vmem %s0, %s226
        $region36: #{rotary_self_attention.3} parent=31 // pred_fallthru
          _
      $region32: #{rotary_self_attention.3} parent=5 // pred_fallthru
        _
      %p228 = scmp.le.s32.totalorder 1, %s14
      %p229 = scmp.lt.s32.totalorder %s14, 5
      %p230 = pnand %p228, %p229
      %p231 = pneg %p230
      // Predicated region
      $region37: #{rotary_self_attention.3} parent=5 // pred_check
        _
      $region38: #{rotary_self_attention.3} parent=5 // pred_check_branch
        %233 = sbr.rel (%p230) target = $region40
      $region39: #{rotary_self_attention.3} parent=5 // pred_region
        %s234 = ssub.s32 %s14, 1
        %p235 = scmp.lt.s32.totalorder %s23, 1
        %s236 = scalar_select %p235, %s23, 1
        %p237 = scmp.lt.s32.totalorder %s24, 1
        %s238 = scalar_select %p237, %s24, 1
        %s239 = smul.addr %s236, 2
        %s240 = sadd.s32 %s238, %s239
        %s241 = smul.addr %s240, 4
        %s242 = scalar_lea.vmem %s0, %s241
        %p243 = pneg %p54
        %p244 = pneg %p51
        %p245 = scmp.lt.s32.totalorder %s23, 1
        %s246 = scalar_select %p245, %s23, 1
        %s247 = smul.addr %s246, 2
        %s248 = smul.addr %s247, 4
        %s249 = scalar_lea.vmem %s1, %s248
        %p250 = pneg %p80
        %p251 = pneg %p77
        %p252 = scmp.lt.s32.totalorder %s23, 1
        %s253 = scalar_select %p252, %s23, 1
        %s254 = smul.addr %s253, 2
        %s255 = smul.addr %s254, 4
        %s256 = scalar_lea.vmem %s2, %s255
        %p257 = pneg %p106
        %p258 = pneg %p103
        %p259 = pneg %p127
        %p260 = pneg %p124
        %p261 = pneg %p148
        %p262 = pneg %p145
        %p263 = pneg %p176
        %p264 = pneg %p173
        %s265 = sand.u32 %s163, 1
        %s266 = scalar_lea.sflag [#allocation4], %s265
        %s267 = sand.u32 %s163, 1
        %s268 = smul.addr %s267, 8
        %s269 = scalar_lea.vmem [#allocation3], %s268
        %p270 = scmp.lt.s32.totalorder %s23, 1
        %s271 = scalar_select %p270, %s23, 1
        %p272 = scmp.lt.s32.totalorder %s24, 1
        %s273 = scalar_select %p272, %s24, 1
        %s274 = smul.addr %s271, 2
        %s275 = sadd.s32 %s273, %s274
        %s276 = smul.addr %s275, 4
        %s277 = scalar_lea.vmem %s0, %s276
        %p278 = scmp.lt.s32.totalorder %s23, 1
        %s279 = scalar_select %p278, %s23, 1
        %s280 = smul.addr %s279, 2
        %s281 = smul.addr %s280, 4
        %s282 = scalar_lea.vmem %s1, %s281
        %p283 = scmp.lt.s32.totalorder %s23, 1
        %s284 = scalar_select %p283, %s23, 1
        %s285 = smul.addr %s284, 2
        %s286 = smul.addr %s285, 4
        %s287 = scalar_lea.vmem %s2, %s286
        %v289 = vld [vmem:[%s277] sm:$0xf]
        %v290 = vld [vmem:[%s282] sm:$0xf]
        %v291 = vld [vmem:[%s287] sm:$0xf]
        %vm292 = vcmask 261120
        %v294 = vsel %vm292, %v289, 0
        %v297 = vsel %vm292, %v290, 0
        %299 = vmatpush.bf16.xpose.msra.mxu0 0
        %300 = vmatpush.bf16.xpose.msra.mxu0 0
        %301 = vmatpush.bf16.xpose.msra.mxu0 0
        %302 = vmatpush.bf16.xpose.msra.mxu0 0
        %303 = vmatpush.bf16.xpose.msra.mxu0 0
        %304 = vmatpush.bf16.xpose.msra.mxu0 0
        %305 = vmatpush.bf16.xpose.msra.mxu0 0
        %306 = vmatpush.bf16.xpose.msra.mxu0 %v297
        %307 = vmatmul.bf16.gmra.mxu0 %v294
        %v308 = vpop.f32.mrf.mxu0
        %v309 = vadd.f32 0.0, %v308
        %v310 = vpop.f32.mrf.mxu0
        %311 = vdwg.mxu0
        %vm312 = vcmask 64512
        %v313 = vsel %vm312, %v309, -inf
        %314 = vmax.xlane.f32.xlu0 %v313
        %v315 = vpop.xlane.xlu0 %314
        %v316 = vsub.f32 -inf, %v315
        %v317 = vmul.f32 %v316, 1.442695
        %v318 = vpow.pop %v317
        %v319 = vsub.f32 %v309, %v315
        %v320 = vmul.f32 %v319, 1.442695
        %v321 = vpow.pop %v320
        %v322 = vmul.f32 %v318, 0.0
        %v323 = vsel %vm312, %v321, 0.0
        %324 = vadd.xlane.f32.xlu0 %v323
        %v325 = vpop.xlane.xlu0 %324
        %v326 = vadd.f32 %v322, %v325
        %v327 = vpack.c.bf16 %v321, %v321
        %v329 = vsel %vm312, %v327, 0
        %vm331 = vcmask 1043456
        %v333 = vsel %vm331, %v291, 0
        %335 = vmatpush.bf16.msra.mxu0 0
        %336 = vmatpush.bf16.msra.mxu0 0
        %337 = vmatpush.bf16.msra.mxu0 0
        %338 = vmatpush.bf16.msra.mxu0 0
        %339 = vmatpush.bf16.msra.mxu0 0
        %340 = vmatpush.bf16.msra.mxu0 0
        %341 = vmatpush.bf16.msra.mxu0 0
        %342 = vmatpush.bf16.msra.mxu0 %v333
        %343 = vmatmul.bf16.gmra.mxu0 %v329
        %v344 = vpop.f32.mrf.mxu0
        %v345 = vadd.f32 0.0, %v344
        %v346 = vpop.f32.mrf.mxu0
        %347 = vdwg.mxu0
        %v348 = vadd.f32 %v322, %v345
        %s349 = scalar_lea.vmem %s282, 4
        %v350 = vld [vmem:[%s349] sm:$0xf]
        %s351 = scalar_lea.vmem %s287, 4
        %v352 = vld [vmem:[%s351] sm:$0xf]
        %v354 = vsel %vm292, %v350, 0
        %356 = vmatpush.bf16.xpose.msra.mxu0 0
        %357 = vmatpush.bf16.xpose.msra.mxu0 0
        %358 = vmatpush.bf16.xpose.msra.mxu0 0
        %359 = vmatpush.bf16.xpose.msra.mxu0 0
        %360 = vmatpush.bf16.xpose.msra.mxu0 0
        %361 = vmatpush.bf16.xpose.msra.mxu0 0
        %362 = vmatpush.bf16.xpose.msra.mxu0 0
        %363 = vmatpush.bf16.xpose.msra.mxu0 %v354
        %364 = vmatmul.bf16.gmra.mxu0 %v294
        %v365 = vpop.f32.mrf.mxu0
        %v366 = vadd.f32 0.0, %v365
        %v367 = vpop.f32.mrf.mxu0
        %368 = vdwg.mxu0
        %v369 = vsel %vm312, %v366, -inf
        %370 = vmax.xlane.f32.xlu0 %v369
        %v371 = vpop.xlane.xlu0 %370
        %v372 = vmax.f32 %v315, %v371
        %v373 = vsub.f32 %v315, %v372
        %v374 = vmul.f32 %v373, 1.442695
        %v375 = vpow.pop %v374
        %v376 = vsub.f32 %v366, %v372
        %v377 = vmul.f32 %v376, 1.442695
        %v378 = vpow.pop %v377
        %v379 = vmul.f32 %v375, %v326
        %v380 = vsel %vm312, %v378, 0.0
        %381 = vadd.xlane.f32.xlu0 %v380
        %v382 = vpop.xlane.xlu0 %381
        %v383 = vadd.f32 %v379, %v382
        %v384 = vmul.f32 %v375, %v348
        %v385 = vpack.c.bf16 %v378, %v378
        %v387 = vsel %vm312, %v385, 0
        %v390 = vsel %vm331, %v352, 0
        %392 = vmatpush.bf16.msra.mxu0 0
        %393 = vmatpush.bf16.msra.mxu0 0
        %394 = vmatpush.bf16.msra.mxu0 0
        %395 = vmatpush.bf16.msra.mxu0 0
        %396 = vmatpush.bf16.msra.mxu0 0
        %397 = vmatpush.bf16.msra.mxu0 0
        %398 = vmatpush.bf16.msra.mxu0 0
        %399 = vmatpush.bf16.msra.mxu0 %v390
        %400 = vmatmul.bf16.gmra.mxu0 %v387
        %v401 = vpop.f32.mrf.mxu0
        %v402 = vadd.f32 0.0, %v401
        %v403 = vpop.f32.mrf.mxu0
        %404 = vdwg.mxu0
        %v405 = vadd.f32 %v384, %v402
        %v406 = vrcp.pop %v383
        %v407 = vmul.f32 %v405, %v406
        %408 = vst.msk [vmem:[#allocation2] sm:$0xff] %vm292, %v407
        %v409 = vld [vmem:[%s282] sm:$0xf]
        %v410 = vld [vmem:[%s287] sm:$0xf]
        %v412 = vunpack.c.l.b16 %v289
        %v413 = vpack.c.b16 %v412, %v412
        %414 = vrot.lane.b32.xlu0 %v413, 96
        %v415 = vpop.permute.xlu0 %414
        %v417 = vunpack.c.l.b16 %v409
        %v418 = vpack.c.b16 %v417, %v417
        %419 = vrot.lane.b32.xlu0 %v418, 96
        %v420 = vpop.permute.xlu0 %419
        %v422 = vsel %vm292, %v415, 0
        %v425 = vsel %vm292, %v420, 0
        %427 = vmatpush.bf16.xpose.msra.mxu0 0
        %428 = vmatpush.bf16.xpose.msra.mxu0 0
        %429 = vmatpush.bf16.xpose.msra.mxu0 0
        %430 = vmatpush.bf16.xpose.msra.mxu0 0
        %431 = vmatpush.bf16.xpose.msra.mxu0 0
        %432 = vmatpush.bf16.xpose.msra.mxu0 0
        %433 = vmatpush.bf16.xpose.msra.mxu0 0
        %434 = vmatpush.bf16.xpose.msra.mxu0 %v425
        %435 = vmatmul.bf16.gmra.mxu0 %v422
        %v436 = vpop.f32.mrf.mxu0
        %v437 = vadd.f32 0.0, %v436
        %v438 = vpop.f32.mrf.mxu0
        %439 = vdwg.mxu0
        %v440 = vsel %vm312, %v437, -inf
        %441 = vmax.xlane.f32.xlu0 %v440
        %v442 = vpop.xlane.xlu0 %441
        %v443 = vsub.f32 -inf, %v442
        %v444 = vmul.f32 %v443, 1.442695
        %v445 = vpow.pop %v444
        %v446 = vsub.f32 %v437, %v442
        %v447 = vmul.f32 %v446, 1.442695
        %v448 = vpow.pop %v447
        %v449 = vmul.f32 %v445, 0.0
        %v450 = vsel %vm312, %v448, 0.0
        %451 = vadd.xlane.f32.xlu0 %v450
        %v452 = vpop.xlane.xlu0 %451
        %v453 = vadd.f32 %v449, %v452
        %v454 = vpack.c.bf16 %v448, %v448
        %v456 = vunpack.c.l.b16 %v410
        %v457 = vpack.c.b16 %v456, %v456
        %458 = vrot.lane.b32.xlu0 %v457, 96
        %v459 = vpop.permute.xlu0 %458
        %v461 = vsel %vm312, %v454, 0
        %v464 = vsel %vm331, %v459, 0
        %466 = vmatpush.bf16.msra.mxu0 0
        %467 = vmatpush.bf16.msra.mxu0 0
        %468 = vmatpush.bf16.msra.mxu0 0
        %469 = vmatpush.bf16.msra.mxu0 0
        %470 = vmatpush.bf16.msra.mxu0 0
        %471 = vmatpush.bf16.msra.mxu0 0
        %472 = vmatpush.bf16.msra.mxu0 0
        %473 = vmatpush.bf16.msra.mxu0 %v464
        %474 = vmatmul.bf16.gmra.mxu0 %v461
        %v475 = vpop.f32.mrf.mxu0
        %v476 = vadd.f32 0.0, %v475
        %v477 = vpop.f32.mrf.mxu0
        %478 = vdwg.mxu0
        %v479 = vadd.f32 %v449, %v476
        %v480 = vld [vmem:[%s349] sm:$0xf]
        %v481 = vld [vmem:[%s351] sm:$0xf]
        %v483 = vunpack.c.l.b16 %v480
        %v484 = vpack.c.b16 %v483, %v483
        %485 = vrot.lane.b32.xlu0 %v484, 96
        %v486 = vpop.permute.xlu0 %485
        %v488 = vsel %vm292, %v486, 0
        %490 = vmatpush.bf16.xpose.msra.mxu0 0
        %491 = vmatpush.bf16.xpose.msra.mxu0 0
        %492 = vmatpush.bf16.xpose.msra.mxu0 0
        %493 = vmatpush.bf16.xpose.msra.mxu0 0
        %494 = vmatpush.bf16.xpose.msra.mxu0 0
        %495 = vmatpush.bf16.xpose.msra.mxu0 0
        %496 = vmatpush.bf16.xpose.msra.mxu0 0
        %497 = vmatpush.bf16.xpose.msra.mxu0 %v488
        %498 = vmatmul.bf16.gmra.mxu0 %v422
        %v499 = vpop.f32.mrf.mxu0
        %v500 = vadd.f32 0.0, %v499
        %v501 = vpop.f32.mrf.mxu0
        %502 = vdwg.mxu0
        %v503 = vsel %vm312, %v500, -inf
        %504 = vmax.xlane.f32.xlu0 %v503
        %v505 = vpop.xlane.xlu0 %504
        %v506 = vmax.f32 %v442, %v505
        %v507 = vsub.f32 %v442, %v506
        %v508 = vmul.f32 %v507, 1.442695
        %v509 = vpow.pop %v508
        %v510 = vsub.f32 %v500, %v506
        %v511 = vmul.f32 %v510, 1.442695
        %v512 = vpow.pop %v511
        %v513 = vmul.f32 %v509, %v453
        %v514 = vsel %vm312, %v512, 0.0
        %515 = vadd.xlane.f32.xlu0 %v514
        %v516 = vpop.xlane.xlu0 %515
        %v517 = vadd.f32 %v513, %v516
        %v518 = vmul.f32 %v509, %v479
        %v519 = vpack.c.bf16 %v512, %v512
        %v521 = vunpack.c.l.b16 %v481
        %v522 = vpack.c.b16 %v521, %v521
        %523 = vrot.lane.b32.xlu0 %v522, 96
        %v524 = vpop.permute.xlu0 %523
        %v526 = vsel %vm312, %v519, 0
        %v529 = vsel %vm331, %v524, 0
        %531 = vmatpush.bf16.msra.mxu0 0
        %532 = vmatpush.bf16.msra.mxu0 0
        %533 = vmatpush.bf16.msra.mxu0 0
        %534 = vmatpush.bf16.msra.mxu0 0
        %535 = vmatpush.bf16.msra.mxu0 0
        %536 = vmatpush.bf16.msra.mxu0 0
        %537 = vmatpush.bf16.msra.mxu0 0
        %538 = vmatpush.bf16.msra.mxu0 %v529
        %539 = vmatmul.bf16.gmra.mxu0 %v526
        %v540 = vpop.f32.mrf.mxu0
        %v541 = vadd.f32 0.0, %v540
        %v542 = vpop.f32.mrf.mxu0
        %543 = vdwg.mxu0
        %v544 = vadd.f32 %v518, %v541
        %v545 = vrcp.pop %v517
        %v546 = vmul.f32 %v544, %v545
        %548 = vrot.lane.b32.xlu0 %v546, 32
        %v549 = vpop.permute.xlu0 %548
        %vm551 = vcmask 523520
        %552 = vst.msk [vmem:[#allocation2] sm:$0xff] %vm551, %v549
        %v553 = vld [vmem:[%s282] sm:$0xf]
        %v554 = vld [vmem:[%s287] sm:$0xf]
        %555 = vrot.lane.b32.xlu0 %v413, 64
        %v556 = vpop.permute.xlu0 %555
        %v558 = vunpack.c.l.b16 %v553
        %v559 = vpack.c.b16 %v558, %v558
        %560 = vrot.lane.b32.xlu0 %v559, 64
        %v561 = vpop.permute.xlu0 %560
        %v563 = vsel %vm292, %v556, 0
        %v566 = vsel %vm292, %v561, 0
        %568 = vmatpush.bf16.xpose.msra.mxu0 0
        %569 = vmatpush.bf16.xpose.msra.mxu0 0
        %570 = vmatpush.bf16.xpose.msra.mxu0 0
        %571 = vmatpush.bf16.xpose.msra.mxu0 0
        %572 = vmatpush.bf16.xpose.msra.mxu0 0
        %573 = vmatpush.bf16.xpose.msra.mxu0 0
        %574 = vmatpush.bf16.xpose.msra.mxu0 0
        %575 = vmatpush.bf16.xpose.msra.mxu0 %v566
        %576 = vmatmul.bf16.gmra.mxu0 %v563
        %v577 = vpop.f32.mrf.mxu0
        %v578 = vadd.f32 0.0, %v577
        %v579 = vpop.f32.mrf.mxu0
        %580 = vdwg.mxu0
        %v581 = vsel %vm312, %v578, -inf
        %582 = vmax.xlane.f32.xlu0 %v581
        %v583 = vpop.xlane.xlu0 %582
        %v584 = vsub.f32 -inf, %v583
        %v585 = vmul.f32 %v584, 1.442695
        %v586 = vpow.pop %v585
        %v587 = vsub.f32 %v578, %v583
        %v588 = vmul.f32 %v587, 1.442695
        %v589 = vpow.pop %v588
        %v590 = vmul.f32 %v586, 0.0
        %v591 = vsel %vm312, %v589, 0.0
        %592 = vadd.xlane.f32.xlu0 %v591
        %v593 = vpop.xlane.xlu0 %592
        %v594 = vadd.f32 %v590, %v593
        %v595 = vpack.c.bf16 %v589, %v589
        %v597 = vunpack.c.l.b16 %v554
        %v598 = vpack.c.b16 %v597, %v597
        %599 = vrot.lane.b32.xlu0 %v598, 64
        %v600 = vpop.permute.xlu0 %599
        %v602 = vsel %vm312, %v595, 0
        %v605 = vsel %vm331, %v600, 0
        %607 = vmatpush.bf16.msra.mxu0 0
        %608 = vmatpush.bf16.msra.mxu0 0
        %609 = vmatpush.bf16.msra.mxu0 0
        %610 = vmatpush.bf16.msra.mxu0 0
        %611 = vmatpush.bf16.msra.mxu0 0
        %612 = vmatpush.bf16.msra.mxu0 0
        %613 = vmatpush.bf16.msra.mxu0 0
        %614 = vmatpush.bf16.msra.mxu0 %v605
        %615 = vmatmul.bf16.gmra.mxu0 %v602
        %v616 = vpop.f32.mrf.mxu0
        %v617 = vadd.f32 0.0, %v616
        %v618 = vpop.f32.mrf.mxu0
        %619 = vdwg.mxu0
        %v620 = vadd.f32 %v590, %v617
        %v621 = vld [vmem:[%s349] sm:$0xf]
        %v622 = vld [vmem:[%s351] sm:$0xf]
        %v624 = vunpack.c.l.b16 %v621
        %v625 = vpack.c.b16 %v624, %v624
        %626 = vrot.lane.b32.xlu0 %v625, 64
        %v627 = vpop.permute.xlu0 %626
        %v629 = vsel %vm292, %v627, 0
        %631 = vmatpush.bf16.xpose.msra.mxu0 0
        %632 = vmatpush.bf16.xpose.msra.mxu0 0
        %633 = vmatpush.bf16.xpose.msra.mxu0 0
        %634 = vmatpush.bf16.xpose.msra.mxu0 0
        %635 = vmatpush.bf16.xpose.msra.mxu0 0
        %636 = vmatpush.bf16.xpose.msra.mxu0 0
        %637 = vmatpush.bf16.xpose.msra.mxu0 0
        %638 = vmatpush.bf16.xpose.msra.mxu0 %v629
        %639 = vmatmul.bf16.gmra.mxu0 %v563
        %v640 = vpop.f32.mrf.mxu0
        %v641 = vadd.f32 0.0, %v640
        %v642 = vpop.f32.mrf.mxu0
        %643 = vdwg.mxu0
        %v644 = vsel %vm312, %v641, -inf
        %645 = vmax.xlane.f32.xlu0 %v644
        %v646 = vpop.xlane.xlu0 %645
        %v647 = vmax.f32 %v583, %v646
        %v648 = vsub.f32 %v583, %v647
        %v649 = vmul.f32 %v648, 1.442695
        %v650 = vpow.pop %v649
        %v651 = vsub.f32 %v641, %v647
        %v652 = vmul.f32 %v651, 1.442695
        %v653 = vpow.pop %v652
        %v654 = vmul.f32 %v650, %v594
        %v655 = vsel %vm312, %v653, 0.0
        %656 = vadd.xlane.f32.xlu0 %v655
        %v657 = vpop.xlane.xlu0 %656
        %v658 = vadd.f32 %v654, %v657
        %v659 = vmul.f32 %v650, %v620
        %v660 = vpack.c.bf16 %v653, %v653
        %v662 = vunpack.c.l.b16 %v622
        %v663 = vpack.c.b16 %v662, %v662
        %664 = vrot.lane.b32.xlu0 %v663, 64
        %v665 = vpop.permute.xlu0 %664
        %v667 = vsel %vm312, %v660, 0
        %v670 = vsel %vm331, %v665, 0
        %672 = vmatpush.bf16.msra.mxu0 0
        %673 = vmatpush.bf16.msra.mxu0 0
        %674 = vmatpush.bf16.msra.mxu0 0
        %675 = vmatpush.bf16.msra.mxu0 0
        %676 = vmatpush.bf16.msra.mxu0 0
        %677 = vmatpush.bf16.msra.mxu0 0
        %678 = vmatpush.bf16.msra.mxu0 0
        %679 = vmatpush.bf16.msra.mxu0 %v670
        %680 = vmatmul.bf16.gmra.mxu0 %v667
        %v681 = vpop.f32.mrf.mxu0
        %v682 = vadd.f32 0.0, %v681
        %v683 = vpop.f32.mrf.mxu0
        %684 = vdwg.mxu0
        %v685 = vadd.f32 %v659, %v682
        %v686 = vrcp.pop %v658
        %v687 = vmul.f32 %v685, %v686
        %689 = vrot.lane.b32.xlu0 %v687, 64
        %v690 = vpop.permute.xlu0 %689
        %vm692 = vcmask 785920
        %693 = vst.msk [vmem:[#allocation2] sm:$0xff] %vm692, %v690
        %v694 = vld [vmem:[%s282] sm:$0xf]
        %v695 = vld [vmem:[%s287] sm:$0xf]
        %696 = vrot.lane.b32.xlu0 %v413, 32
        %v697 = vpop.permute.xlu0 %696
        %v699 = vunpack.c.l.b16 %v694
        %v700 = vpack.c.b16 %v699, %v699
        %701 = vrot.lane.b32.xlu0 %v700, 32
        %v702 = vpop.permute.xlu0 %701
        %v704 = vsel %vm292, %v697, 0
        %v707 = vsel %vm292, %v702, 0
        %709 = vmatpush.bf16.xpose.msra.mxu0 0
        %710 = vmatpush.bf16.xpose.msra.mxu0 0
        %711 = vmatpush.bf16.xpose.msra.mxu0 0
        %712 = vmatpush.bf16.xpose.msra.mxu0 0
        %713 = vmatpush.bf16.xpose.msra.mxu0 0
        %714 = vmatpush.bf16.xpose.msra.mxu0 0
        %715 = vmatpush.bf16.xpose.msra.mxu0 0
        %716 = vmatpush.bf16.xpose.msra.mxu0 %v707
        %717 = vmatmul.bf16.gmra.mxu0 %v704
        %v718 = vpop.f32.mrf.mxu0
        %v719 = vadd.f32 0.0, %v718
        %v720 = vpop.f32.mrf.mxu0
        %721 = vdwg.mxu0
        %v722 = vsel %vm312, %v719, -inf
        %723 = vmax.xlane.f32.xlu0 %v722
        %v724 = vpop.xlane.xlu0 %723
        %v725 = vsub.f32 -inf, %v724
        %v726 = vmul.f32 %v725, 1.442695
        %v727 = vpow.pop %v726
        %v728 = vsub.f32 %v719, %v724
        %v729 = vmul.f32 %v728, 1.442695
        %v730 = vpow.pop %v729
        %v731 = vmul.f32 %v727, 0.0
        %v732 = vsel %vm312, %v730, 0.0
        %733 = vadd.xlane.f32.xlu0 %v732
        %v734 = vpop.xlane.xlu0 %733
        %v735 = vadd.f32 %v731, %v734
        %v736 = vpack.c.bf16 %v730, %v730
        %v738 = vunpack.c.l.b16 %v695
        %v739 = vpack.c.b16 %v738, %v738
        %740 = vrot.lane.b32.xlu0 %v739, 32
        %v741 = vpop.permute.xlu0 %740
        %v743 = vsel %vm312, %v736, 0
        %v746 = vsel %vm331, %v741, 0
        %748 = vmatpush.bf16.msra.mxu0 0
        %749 = vmatpush.bf16.msra.mxu0 0
        %750 = vmatpush.bf16.msra.mxu0 0
        %751 = vmatpush.bf16.msra.mxu0 0
        %752 = vmatpush.bf16.msra.mxu0 0
        %753 = vmatpush.bf16.msra.mxu0 0
        %754 = vmatpush.bf16.msra.mxu0 0
        %755 = vmatpush.bf16.msra.mxu0 %v746
        %756 = vmatmul.bf16.gmra.mxu0 %v743
        %v757 = vpop.f32.mrf.mxu0
        %v758 = vadd.f32 0.0, %v757
        %v759 = vpop.f32.mrf.mxu0
        %760 = vdwg.mxu0
        %v761 = vadd.f32 %v731, %v758
        %v762 = vld [vmem:[%s349] sm:$0xf]
        %v763 = vld [vmem:[%s351] sm:$0xf]
        %v765 = vunpack.c.l.b16 %v762
        %v766 = vpack.c.b16 %v765, %v765
        %767 = vrot.lane.b32.xlu0 %v766, 32
        %v768 = vpop.permute.xlu0 %767
        %v770 = vsel %vm292, %v768, 0
        %772 = vmatpush.bf16.xpose.msra.mxu0 0
        %773 = vmatpush.bf16.xpose.msra.mxu0 0
        %774 = vmatpush.bf16.xpose.msra.mxu0 0
        %775 = vmatpush.bf16.xpose.msra.mxu0 0
        %776 = vmatpush.bf16.xpose.msra.mxu0 0
        %777 = vmatpush.bf16.xpose.msra.mxu0 0
        %778 = vmatpush.bf16.xpose.msra.mxu0 0
        %779 = vmatpush.bf16.xpose.msra.mxu0 %v770
        %780 = vmatmul.bf16.gmra.mxu0 %v704
        %v781 = vpop.f32.mrf.mxu0
        %v782 = vadd.f32 0.0, %v781
        %v783 = vpop.f32.mrf.mxu0
        %784 = vdwg.mxu0
        %v785 = vsel %vm312, %v782, -inf
        %786 = vmax.xlane.f32.xlu0 %v785
        %v787 = vpop.xlane.xlu0 %786
        %v788 = vmax.f32 %v724, %v787
        %v789 = vsub.f32 %v724, %v788
        %v790 = vmul.f32 %v789, 1.442695
        %v791 = vpow.pop %v790
        %v792 = vsub.f32 %v782, %v788
        %v793 = vmul.f32 %v792, 1.442695
        %v794 = vpow.pop %v793
        %v795 = vmul.f32 %v791, %v735
        %v796 = vsel %vm312, %v794, 0.0
        %797 = vadd.xlane.f32.xlu0 %v796
        %v798 = vpop.xlane.xlu0 %797
        %v799 = vadd.f32 %v795, %v798
        %v800 = vmul.f32 %v791, %v761
        %v801 = vpack.c.bf16 %v794, %v794
        %v803 = vunpack.c.l.b16 %v763
        %v804 = vpack.c.b16 %v803, %v803
        %805 = vrot.lane.b32.xlu0 %v804, 32
        %v806 = vpop.permute.xlu0 %805
        %v808 = vsel %vm312, %v801, 0
        %v811 = vsel %vm331, %v806, 0
        %813 = vmatpush.bf16.msra.mxu0 0
        %814 = vmatpush.bf16.msra.mxu0 0
        %815 = vmatpush.bf16.msra.mxu0 0
        %816 = vmatpush.bf16.msra.mxu0 0
        %817 = vmatpush.bf16.msra.mxu0 0
        %818 = vmatpush.bf16.msra.mxu0 0
        %819 = vmatpush.bf16.msra.mxu0 0
        %820 = vmatpush.bf16.msra.mxu0 %v811
        %821 = vmatmul.bf16.gmra.mxu0 %v808
        %v822 = vpop.f32.mrf.mxu0
        %v823 = vadd.f32 0.0, %v822
        %v824 = vpop.f32.mrf.mxu0
        %825 = vdwg.mxu0
        %v826 = vadd.f32 %v800, %v823
        %v827 = vrcp.pop %v799
        %v828 = vmul.f32 %v826, %v827
        %830 = vrot.lane.b32.xlu0 %v828, 96
        %v831 = vpop.permute.xlu0 %830
        %vm833 = vcmask 1048320
        %834 = vst.msk [vmem:[#allocation2] sm:$0xff] %vm833, %v831
        %v835 = vld [vmem:[#allocation2] sm:$0xff]
        %v836 = vpack.c.bf16 %v835, %v835
        %v837 = vld [vmem:[%s3] sm:$0xf]
        %v838 = vld [vmem:[%s3 + $0x4] sm:$0xf]
        %v839 = vld [vmem:[%s3 + $0x8] sm:$0xf]
        %v840 = vld [vmem:[%s3 + $0xc] sm:$0xf]
        %v841 = vld [vmem:[%s3 + $0x10] sm:$0xf]
        %v842 = vld [vmem:[%s3 + $0x14] sm:$0xf]
        %v843 = vld [vmem:[%s3 + $0x18] sm:$0xf]
        %v844 = vld [vmem:[%s3 + $0x1c] sm:$0xf]
        %v845 = vld [vmem:[%s3 + $0x20] sm:$0xf]
        %v846 = vld [vmem:[%s3 + $0x24] sm:$0xf]
        %v847 = vld [vmem:[%s3 + $0x28] sm:$0xf]
        %v848 = vld [vmem:[%s3 + $0x2c] sm:$0xf]
        %v849 = vld [vmem:[%s3 + $0x30] sm:$0xf]
        %v850 = vld [vmem:[%s3 + $0x34] sm:$0xf]
        %v851 = vld [vmem:[%s3 + $0x38] sm:$0xf]
        %v852 = vld [vmem:[%s3 + $0x3c] sm:$0xf]
        %v853 = vld [vmem:[%s4] sm:$0x1]
        %v855 = vperm.slane %v853, 0
        %v873 = vunpack.c.l.b16 %v837
        %v874 = vunpack.c.l.b16 %v838
        %v875 = vunpack.c.l.b16 %v839
        %v876 = vunpack.c.l.b16 %v840
        %v877 = vunpack.c.l.b16 %v841
        %v878 = vunpack.c.l.b16 %v842
        %v879 = vunpack.c.l.b16 %v843
        %v880 = vunpack.c.l.b16 %v844
        %v881 = vunpack.c.l.b16 %v845
        %v882 = vunpack.c.l.b16 %v846
        %v883 = vunpack.c.l.b16 %v847
        %v884 = vunpack.c.l.b16 %v848
        %v885 = vunpack.c.l.b16 %v849
        %v886 = vunpack.c.l.b16 %v850
        %v887 = vunpack.c.l.b16 %v851
        %v888 = vunpack.c.l.b16 %v852
        %v889 = vpack.c.b16 %v874, %v873
        %v890 = vpack.c.b16 %v876, %v875
        %v891 = vpack.c.b16 %v878, %v877
        %v892 = vpack.c.b16 %v880, %v879
        %v893 = vpack.c.b16 %v882, %v881
        %v894 = vpack.c.b16 %v884, %v883
        %v895 = vpack.c.b16 %v886, %v885
        %v896 = vpack.c.b16 %v888, %v887
        %905 = vmatpush.bf16.msra.mxu0 %v896
        %906 = vmatpush.bf16.msra.mxu0 %v895
        %907 = vmatpush.bf16.msra.mxu0 %v894
        %908 = vmatpush.bf16.msra.mxu0 %v893
        %909 = vmatpush.bf16.msra.mxu0 %v892
        %910 = vmatpush.bf16.msra.mxu0 %v891
        %911 = vmatpush.bf16.msra.mxu0 %v890
        %912 = vmatpush.bf16.msra.mxu0 %v889
        %913 = vmatmul.bf16.gmra.mxu0 %v836
        %v914 = vpop.f32.mrf.mxu0
        %v915 = vadd.f32 %v855, %v914
        %v916 = vpop.f32.mrf.mxu0
        %917 = vdwg.mxu0
        %918 = vst [vmem:[%s269] sm:$0xff] %v915
        %s919 = sand.u32 %s163, 1
        %s920 = scalar_lea.sflag [#allocation4], %s919
        %s921 = sand.u32 %s163, 1
        %s922 = smul.addr %s921, 8
        %s923 = scalar_lea.vmem [#allocation3], %s922
        // Predicated region
        $region41: #{rotary_self_attention.3} parent=39 // pred_check
          %p924 = pneg %p173
        $region42: #{rotary_self_attention.3} parent=39 // pred_check_branch
          %926 = sbr.rel (%p924) target = $region44
        $region43: #{rotary_self_attention.3} parent=39 // pred_region
          %928 = vsyncadd %s920, 0
          %s929 = smul.addr %s23, 2
          %s930 = sadd.s32 %s24, %s929
          %s931 = smul.addr %s930, 8
          %s932 = scalar_lea.hbm %s5, %s931
          %s934 = sshll.u32 %s923, 4
          %s935 = int_to_ptr.vmem [resolvable:$true] %s934
          %s936 = sshll.u32 %s932, 4
          %s937 = int_to_ptr.hbm [resolvable:$true] %s936
          %939 = dma.vmem_to_hbm [thread:$0]  %s935, 128, %s937, %s920
        $region44: #{rotary_self_attention.3} parent=39 // pred_fallthru
          _
      $region40: #{rotary_self_attention.3} parent=5 // pred_fallthru
        _
      %p940 = scmp.le.s32.totalorder 2, %s14
      // Predicated region
      $region45: #{rotary_self_attention.3} parent=5 // pred_check
        %p941 = pneg %p940
      $region46: #{rotary_self_attention.3} parent=5 // pred_check_branch
        %943 = sbr.rel (%p941) target = $region48
      $region47: #{rotary_self_attention.3} parent=5 // pred_region
        %s944 = ssub.s32 %s14, 2
        // Predicated region
        $region49: #{rotary_self_attention.3} parent=47 // pred_check
          %p945 = pneg %p179
        $region50: #{rotary_self_attention.3} parent=47 // pred_check_branch
          %947 = sbr.rel (%p945) target = $region52
        $region51: #{rotary_self_attention.3} parent=47 // pred_region
          %s948 = sand.u32 %s164, 1
          %s949 = scalar_lea.sflag [#allocation4], %s948
          %s950 = sand.u32 %s164, 1
          %s951 = smul.addr %s950, 8
          %s952 = scalar_lea.vmem [#allocation3], %s951
          %954 = dma.done %s949, 128
        $region52: #{rotary_self_attention.3} parent=47 // pred_fallthru
          _
      $region48: #{rotary_self_attention.3} parent=5 // pred_fallthru
        _
    $region6: #{rotary_self_attention.3} parent=1 // loop_footer
      %s18 = sadd.s32 1, %s14
    $region7: #{rotary_self_attention.3} parent=1 // loop_footer_branch
      %13 = sbr.rel target = $region3
    $region8: #{rotary_self_attention.3} parent=1 // loop_exit
      _
    %955 = vsyncpa [#allocation4], 1
    %s956 = scalar_lea.sflag [#allocation4], 1
    %957 = vsyncpa %s956, 1

</llo_original>
